<compile_context>
chip_gen: v7x
topology: tpu7x:2x2x1
jax: 0.10.0
libtpu: 0.0.40
codegen_flags: <defaults>
</compile_context>

<pallas_src>
import functools

import jax
import jax.numpy as jnp
from jax.experimental import pallas as pl
from jax.experimental.pallas import tpu as pltpu


# ---------------------------------------------------------------------------
# trace-time helpers (run in the wrapper, not inside the kernel)
# ---------------------------------------------------------------------------

def _attn_row_mat(attn, num_heads, head_dim):
    """attn [H, D] -> [H, H*D]; row h holds attn[h] in cols [h*D:(h+1)*D]."""
    eye = jnp.eye(num_heads, dtype=jnp.float32)
    a = eye[:, :, None] * attn.astype(jnp.float32)[None, :, :]   # [H, H, D]
    return a.reshape(num_heads, num_heads * head_dim)


def _attn_col_mat(attn, num_heads, head_dim):
    """attn [H, D] -> [H*D, H]; column h holds attn[h] in rows [h*D:(h+1)*D]."""
    return _attn_row_mat(attn, num_heads, head_dim).T


def _estimate_vmem_bytes(n, in_dim, hd, n_classes, num_layers):
    nn = n * n
    act = 4 * n * (in_dim + 4 * hd + n_classes)        # feats / h / residual / outputs
    attn = 4 * 4 * nn                                  # adj mask + e/p temporaries
    weights = 4 * (2 * in_dim * hd + max(num_layers - 1, 0) * hd * hd
                   + hd * n_classes + 8 * hd)
    est = 2 * (act + attn + weights) + (1 << 20)
    return int(min(max(est, 16 * 2 ** 20), 48 * 2 ** 20))


# ---------------------------------------------------------------------------
# fused kernel: all GAT layers + BatchNorm + Linear
# ---------------------------------------------------------------------------

def fused_gat_kernel(*refs, num_layers, num_heads, head_dim, negative_slope,
                     res_identity, bn_eps):
    it = iter(refs)
    feat_ref = next(it)
    adj_ref = next(it)
    layer_refs = []
    for l in range(num_layers):
        w_ref = next(it)      # [Fin, H*D]  bf16
        al_ref = next(it)     # [H, H*D]    f32   (block "row" attn_l matrix)
        ar_ref = next(it)     # [H*D, H]    f32   (block "col" attn_r matrix)
        b_ref = next(it)      # [1, H*D]    f32
        rw_ref = None if res_identity[l] else next(it)   # [Fin, H*D] bf16
        layer_refs.append((w_ref, al_ref, ar_ref, b_ref, rw_ref))
    gamma_ref = next(it)      # [1, H*D]
    beta_ref = next(it)       # [1, H*D]
    fcw_ref = next(it)        # [H*D, C]   bf16
    fcb_ref = next(it)        # [1, C]
    out_ref = next(it)        # [N, C]

    adj_mask = adj_ref[...] > 0          # computed once, reused by every head/layer
    neg_big = jnp.float32(-1e9)

    x = feat_ref[...]                    # f32 [N, Fin]
    for w_ref, al_ref, ar_ref, b_ref, rw_ref in layer_refs:
        x_bf = x.astype(jnp.bfloat16)
        # feature projection (bf16 MXU, f32 accumulate)
        h = jnp.dot(x_bf, w_ref[...], preferred_element_type=jnp.float32)   # [N, H*D]
        if rw_ref is None:
            resval = x                                   # identity residual (no matmul)
        else:
            resval = jnp.dot(x_bf, rw_ref[...], preferred_element_type=jnp.float32)

        # attention logits for all heads via MXU matmuls (no per-head reductions)
        er_nh = jnp.dot(h, ar_ref[...], preferred_element_type=jnp.float32)  # [N, H] dst
        el_hn = jax.lax.dot_general(                                         # [H, N] src
            al_ref[...], h, (((1,), (1,)), ((), ())),
            preferred_element_type=jnp.float32)

        bias_row = b_ref[...]                             # hoisted out of head loop
        h_bf = h.astype(jnp.bfloat16)

        head_outs = []
        for head in range(num_heads):                     # static unrolled loop
            lo = head * head_dim
            e = er_nh[:, head:head + 1] + el_hn[head:head + 1, :]   # [N_dst, N_src]
            e = jnp.where(e > 0, e, negative_slope * e)             # LeakyReLU
            e = jnp.where(adj_mask, e, neg_big)                     # mask non-edges
            e = e - jnp.max(e, axis=-1, keepdims=True)
            p = jnp.exp(e)
            row_sum = jnp.sum(p, axis=-1, keepdims=True)
            # aggregate un-normalized, then scale by 1/rowsum (N divides, not N^2)
            agg = jnp.dot(p.astype(jnp.bfloat16), h_bf[:, lo:lo + head_dim],
                          preferred_element_type=jnp.float32)        # [N, D]
            agg = agg * pl.reciprocal(row_sum, approx=True)
            head_outs.append(agg + resval[:, lo:lo + head_dim]
                             + bias_row[:, lo:lo + head_dim])
        o = jnp.concatenate(head_outs, axis=-1)           # [N, H*D], lane-dense
        x = jnp.where(o > 0, o, jnp.exp(jnp.minimum(o, 0.0)) - 1.0)  # ELU (safe exp)

    # BatchNorm1d (training-mode batch statistics, single pass) + Linear head
    inv_n = jnp.float32(1.0 / x.shape[0])
    mean = jnp.sum(x, axis=0, keepdims=True) * inv_n
    ex2 = jnp.sum(x * x, axis=0, keepdims=True) * inv_n
    var = ex2 - mean * mean                               # biased var (BN training fwd)
    inv = jax.lax.rsqrt(var + bn_eps)
    xn = (x - mean) * inv * gamma_ref[...] + beta_ref[...]
    out_ref[...] = jnp.dot(xn.astype(jnp.bfloat16), fcw_ref[...],
                           preferred_element_type=jnp.float32) + fcb_ref[...]


# ---------------------------------------------------------------------------
# wrapper
# ---------------------------------------------------------------------------

def gat_contrastive_forward(adj, feat, params, *, num_heads, head_dim,
                            negative_slope, bn_eps=1e-5):
    n, in_dim = feat.shape
    hd = num_heads * head_dim
    num_layers = len(params["gat_layers"])
    n_classes = params["fc_w"].shape[1]

    refs = [feat.astype(jnp.float32), (adj > 0).astype(jnp.bfloat16)]
    res_identity = []
    for lp in params["gat_layers"]:
        a_l_row = _attn_row_mat(lp["attn_l"], num_heads, head_dim)   # [H, H*D]
        a_r_col = _attn_col_mat(lp["attn_r"], num_heads, head_dim)   # [H*D, H]
        refs += [lp["w"].astype(jnp.bfloat16), a_l_row, a_r_col,
                 lp["bias"].astype(jnp.float32)]
        identity = lp.get("res_w") is None
        res_identity.append(identity)
        if not identity:
            refs.append(lp["res_w"].astype(jnp.bfloat16))
    refs += [params["bn_gamma"].astype(jnp.float32),
             params["bn_beta"].astype(jnp.float32),
             params["fc_w"].astype(jnp.bfloat16),
             params["fc_b"].astype(jnp.float32)]

    kern = functools.partial(
        fused_gat_kernel, num_layers=num_layers, num_heads=num_heads,
        head_dim=head_dim, negative_slope=negative_slope,
        res_identity=tuple(res_identity), bn_eps=bn_eps)

    return pl.pallas_call(
        kern,
        out_shape=jax.ShapeDtypeStruct((n, n_classes), jnp.float32),
        in_specs=[pl.BlockSpec(memory_space=pltpu.MemorySpace.VMEM)] * len(refs),
        out_specs=pl.BlockSpec(memory_space=pltpu.MemorySpace.VMEM),
        compiler_params=pltpu.CompilerParams(
            vmem_limit_bytes=_estimate_vmem_bytes(n, in_dim, hd, n_classes,
                                                  num_layers)),
    )(*refs)


def init_params(key, in_dim, hidden_dim, num_heads, num_layers, node_classes):
    hd = hidden_dim * num_heads
    params = {"gat_layers": []}
    fin = in_dim
    for _ in range(num_layers):
        key, k1, k2, k3, k4 = jax.random.split(key, 5)
        w = 0.1 * jax.random.normal(k1, (fin, hd), jnp.float32)
        attn_l = 0.1 * jax.random.normal(k2, (num_heads, hidden_dim), jnp.float32)
        attn_r = 0.1 * jax.random.normal(k3, (num_heads, hidden_dim), jnp.float32)
        if fin == hd:
            res_w = None                                  # DGL Identity residual
        else:
            res_w = 0.1 * jax.random.normal(k4, (fin, hd), jnp.float32)
        bias = jnp.zeros((1, hd), jnp.float32)
        params["gat_layers"].append(
            {"w": w, "attn_l": attn_l, "attn_r": attn_r, "res_w": res_w,
             "bias": bias})
        fin = hd
    key, k5, k6 = jax.random.split(key, 3)
    params["bn_gamma"] = jnp.ones((1, hd), jnp.float32)
    params["bn_beta"] = jnp.zeros((1, hd), jnp.float32)
    params["fc_w"] = 0.1 * jax.random.normal(k5, (hd, node_classes), jnp.float32)
    params["fc_b"] = 0.01 * jax.random.normal(k6, (1, node_classes), jnp.float32)
    return params


if __name__ == "__main__":
    # small, module-consistent shapes
    N = 64            # nodes
    IN_DIM = 48
    HIDDEN = 16
    HEADS = 2
    LAYERS = 2
    CLASSES = 4
    NEG_SLOPE = 0.2

    key = jax.random.PRNGKey(0)
    key, kf, ka = jax.random.split(key, 3)

    feat = jax.random.normal(kf, (N, IN_DIM), jnp.float32)
    # random directed graph + self-loops, dense adjacency mask adj[dst, src]
    adj = (jax.random.uniform(ka, (N, N)) < 0.2).astype(jnp.float32)
    adj = jnp.maximum(adj, jnp.eye(N, dtype=jnp.float32))

    params = init_params(key, IN_DIM, HIDDEN, HEADS, LAYERS, CLASSES)

    fwd = jax.jit(functools.partial(gat_contrastive_forward,
                                    num_heads=HEADS, head_dim=HIDDEN,
                                    negative_slope=NEG_SLOPE))
    preds = fwd(adj, feat, params)
    jax.block_until_ready(preds)
    assert preds.shape == (N, CLASSES)
    assert bool(jnp.all(jnp.isfinite(preds)))
    print("KERNEL_OK")
</pallas_src>

<mosaic_0001>
module attributes {stable_mosaic.version = 11 : i64} {
  func.func @fused_gat_kernel(%arg0: memref<64x48xf32, #tpu.memory_space<vmem>>, %arg1: memref<64x64xbf16, #tpu.memory_space<vmem>>, %arg2: memref<48x32xbf16, #tpu.memory_space<vmem>>, %arg3: memref<2x32xf32, #tpu.memory_space<vmem>>, %arg4: memref<32x2xf32, #tpu.memory_space<vmem>>, %arg5: memref<1x32xf32, #tpu.memory_space<vmem>>, %arg6: memref<48x32xbf16, #tpu.memory_space<vmem>>, %arg7: memref<32x32xbf16, #tpu.memory_space<vmem>>, %arg8: memref<2x32xf32, #tpu.memory_space<vmem>>, %arg9: memref<32x2xf32, #tpu.memory_space<vmem>>, %arg10: memref<1x32xf32, #tpu.memory_space<vmem>>, %arg11: memref<1x32xf32, #tpu.memory_space<vmem>>, %arg12: memref<1x32xf32, #tpu.memory_space<vmem>>, %arg13: memref<32x4xbf16, #tpu.memory_space<vmem>>, %arg14: memref<1x4xf32, #tpu.memory_space<vmem>>, %arg15: memref<64x4xf32, #tpu.memory_space<vmem>>) attributes {dimension_semantics = [], scalar_prefetch = 0 : i64, scratch_operands = 0 : i64, tpu.core_type = #tpu.core_type<tc>} {
    %c0 = arith.constant 0 : index
    %c0_0 = arith.constant 0 : index
    %0 = vector.load %arg1[%c0, %c0_0] : memref<64x64xbf16, #tpu.memory_space<vmem>>, vector<64x64xbf16>
    %cst = arith.constant 0.000000e+00 : bf16
    %1 = vector.broadcast %cst : bf16 to vector<64x64xbf16>
    %2 = arith.cmpf ogt, %0, %1 : vector<64x64xbf16>
    %c0_1 = arith.constant 0 : index
    %c0_2 = arith.constant 0 : index
    %3 = vector.load %arg0[%c0_1, %c0_2] : memref<64x48xf32, #tpu.memory_space<vmem>>, vector<64x48xf32>
    %4 = arith.truncf %3 : vector<64x48xf32> to vector<64x48xbf16>
    %c0_3 = arith.constant 0 : index
    %c0_4 = arith.constant 0 : index
    %5 = vector.load %arg2[%c0_3, %c0_4] : memref<48x32xbf16, #tpu.memory_space<vmem>>, vector<48x32xbf16>
    %cst_5 = arith.constant dense<0.000000e+00> : vector<64x32xf32>
    %6 = tpu.matmul %4, %5, %cst_5 {dimension_numbers = #tpu.dot_dimension_numbers<[1], [0], [0], [1], [0, 0, 1, 1], [], []>} : vector<64x48xbf16>, vector<48x32xbf16>, vector<64x32xf32> -> vector<64x32xf32>
    %c0_6 = arith.constant 0 : index
    %c0_7 = arith.constant 0 : index
    %7 = vector.load %arg6[%c0_6, %c0_7] : memref<48x32xbf16, #tpu.memory_space<vmem>>, vector<48x32xbf16>
    %cst_8 = arith.constant dense<0.000000e+00> : vector<64x32xf32>
    %8 = tpu.matmul %4, %7, %cst_8 {dimension_numbers = #tpu.dot_dimension_numbers<[1], [0], [0], [1], [0, 0, 1, 1], [], []>} : vector<64x48xbf16>, vector<48x32xbf16>, vector<64x32xf32> -> vector<64x32xf32>
    %c0_9 = arith.constant 0 : index
    %c0_10 = arith.constant 0 : index
    %9 = vector.load %arg4[%c0_9, %c0_10] : memref<32x2xf32, #tpu.memory_space<vmem>>, vector<32x2xf32>
    %cst_11 = arith.constant dense<0.000000e+00> : vector<64x2xf32>
    %10 = tpu.matmul %6, %9, %cst_11 {dimension_numbers = #tpu.dot_dimension_numbers<[1], [0], [0], [1], [0, 0, 1, 1], [], []>} : vector<64x32xf32>, vector<32x2xf32>, vector<64x2xf32> -> vector<64x2xf32>
    %c0_12 = arith.constant 0 : index
    %c0_13 = arith.constant 0 : index
    %11 = vector.load %arg3[%c0_12, %c0_13] : memref<2x32xf32, #tpu.memory_space<vmem>>, vector<2x32xf32>
    %cst_14 = arith.constant dense<0.000000e+00> : vector<2x64xf32>
    %12 = tpu.matmul %11, %6, %cst_14 {dimension_numbers = #tpu.dot_dimension_numbers<[1], [1], [0], [0], [0, 0, 1, 0], [], []>} : vector<2x32xf32>, vector<64x32xf32>, vector<2x64xf32> -> vector<2x64xf32>
    %c0_15 = arith.constant 0 : index
    %c0_16 = arith.constant 0 : index
    %13 = vector.load %arg5[%c0_15, %c0_16] : memref<1x32xf32, #tpu.memory_space<vmem>>, vector<1x32xf32>
    %14 = arith.truncf %6 : vector<64x32xf32> to vector<64x32xbf16>
    %15 = vector.extract_strided_slice %10 {offsets = [0, 0], sizes = [64, 1], strides = [1, 1]} : vector<64x2xf32> to vector<64x1xf32>
    %16 = vector.extract_strided_slice %12 {offsets = [0, 0], sizes = [1, 64], strides = [1, 1]} : vector<2x64xf32> to vector<1x64xf32>
    %17 = vector.broadcast %15 : vector<64x1xf32> to vector<64x64xf32>
    %18 = vector.broadcast %16 : vector<1x64xf32> to vector<64x64xf32>
    %19 = arith.addf %17, %18 : vector<64x64xf32>
    %cst_17 = arith.constant 0.000000e+00 : f32
    %20 = vector.broadcast %cst_17 : f32 to vector<64x64xf32>
    %21 = arith.cmpf ogt, %19, %20 : vector<64x64xf32>
    %cst_18 = arith.constant 2.000000e-01 : f32
    %22 = vector.broadcast %cst_18 : f32 to vector<64x64xf32>
    %23 = arith.mulf %22, %19 : vector<64x64xf32>
    %24 = arith.select %21, %19, %23 : vector<64x64xi1>, vector<64x64xf32>
    %cst_19 = arith.constant -1.000000e+09 : f32
    %25 = vector.broadcast %cst_19 : f32 to vector<64x64xf32>
    %26 = arith.select %2, %24, %25 : vector<64x64xi1>, vector<64x64xf32>
    %cst_20 = arith.constant dense<0xFF800000> : vector<64xf32>
    %27 = vector.multi_reduction <maximumf>, %26, %cst_20 [1] : vector<64x64xf32> to vector<64xf32>
    %28 = vector.shape_cast %27 : vector<64xf32> to vector<64x1xf32>
    %29 = vector.broadcast %28 : vector<64x1xf32> to vector<64x64xf32>
    %30 = arith.subf %26, %29 : vector<64x64xf32>
    %31 = math.exp %30 : vector<64x64xf32>
    %cst_21 = arith.constant dense<0.000000e+00> : vector<64xf32>
    %32 = vector.multi_reduction <add>, %31, %cst_21 [1] : vector<64x64xf32> to vector<64xf32>
    %33 = vector.shape_cast %32 : vector<64xf32> to vector<64x1xf32>
    %34 = arith.truncf %31 : vector<64x64xf32> to vector<64x64xbf16>
    %35 = vector.extract_strided_slice %14 {offsets = [0, 0], sizes = [64, 16], strides = [1, 1]} : vector<64x32xbf16> to vector<64x16xbf16>
    %cst_22 = arith.constant dense<0.000000e+00> : vector<64x16xf32>
    %36 = tpu.matmul %34, %35, %cst_22 {dimension_numbers = #tpu.dot_dimension_numbers<[1], [0], [0], [1], [0, 0, 1, 1], [], []>} : vector<64x64xbf16>, vector<64x16xbf16>, vector<64x16xf32> -> vector<64x16xf32>
    %37 = tpu.reciprocal %33 {approx = true} : vector<64x1xf32> -> vector<64x1xf32>
    %38 = vector.broadcast %37 : vector<64x1xf32> to vector<64x16xf32>
    %39 = arith.mulf %36, %38 : vector<64x16xf32>
    %40 = vector.extract_strided_slice %8 {offsets = [0, 0], sizes = [64, 16], strides = [1, 1]} : vector<64x32xf32> to vector<64x16xf32>
    %41 = arith.addf %39, %40 : vector<64x16xf32>
    %42 = vector.extract_strided_slice %13 {offsets = [0, 0], sizes = [1, 16], strides = [1, 1]} : vector<1x32xf32> to vector<1x16xf32>
    %43 = vector.broadcast %42 : vector<1x16xf32> to vector<64x16xf32>
    %44 = arith.addf %41, %43 : vector<64x16xf32>
    %45 = vector.extract_strided_slice %10 {offsets = [0, 1], sizes = [64, 1], strides = [1, 1]} : vector<64x2xf32> to vector<64x1xf32>
    %46 = vector.extract_strided_slice %12 {offsets = [1, 0], sizes = [1, 64], strides = [1, 1]} : vector<2x64xf32> to vector<1x64xf32>
    %47 = vector.broadcast %45 : vector<64x1xf32> to vector<64x64xf32>
    %48 = vector.broadcast %46 : vector<1x64xf32> to vector<64x64xf32>
    %49 = arith.addf %47, %48 : vector<64x64xf32>
    %cst_23 = arith.constant 0.000000e+00 : f32
    %50 = vector.broadcast %cst_23 : f32 to vector<64x64xf32>
    %51 = arith.cmpf ogt, %49, %50 : vector<64x64xf32>
    %cst_24 = arith.constant 2.000000e-01 : f32
    %52 = vector.broadcast %cst_24 : f32 to vector<64x64xf32>
    %53 = arith.mulf %52, %49 : vector<64x64xf32>
    %54 = arith.select %51, %49, %53 : vector<64x64xi1>, vector<64x64xf32>
    %cst_25 = arith.constant -1.000000e+09 : f32
    %55 = vector.broadcast %cst_25 : f32 to vector<64x64xf32>
    %56 = arith.select %2, %54, %55 : vector<64x64xi1>, vector<64x64xf32>
    %cst_26 = arith.constant dense<0xFF800000> : vector<64xf32>
    %57 = vector.multi_reduction <maximumf>, %56, %cst_26 [1] : vector<64x64xf32> to vector<64xf32>
    %58 = vector.shape_cast %57 : vector<64xf32> to vector<64x1xf32>
    %59 = vector.broadcast %58 : vector<64x1xf32> to vector<64x64xf32>
    %60 = arith.subf %56, %59 : vector<64x64xf32>
    %61 = math.exp %60 : vector<64x64xf32>
    %cst_27 = arith.constant dense<0.000000e+00> : vector<64xf32>
    %62 = vector.multi_reduction <add>, %61, %cst_27 [1] : vector<64x64xf32> to vector<64xf32>
    %63 = vector.shape_cast %62 : vector<64xf32> to vector<64x1xf32>
    %64 = arith.truncf %61 : vector<64x64xf32> to vector<64x64xbf16>
    %65 = vector.extract_strided_slice %14 {offsets = [0, 16], sizes = [64, 16], strides = [1, 1]} : vector<64x32xbf16> to vector<64x16xbf16>
    %cst_28 = arith.constant dense<0.000000e+00> : vector<64x16xf32>
    %66 = tpu.matmul %64, %65, %cst_28 {dimension_numbers = #tpu.dot_dimension_numbers<[1], [0], [0], [1], [0, 0, 1, 1], [], []>} : vector<64x64xbf16>, vector<64x16xbf16>, vector<64x16xf32> -> vector<64x16xf32>
    %67 = tpu.reciprocal %63 {approx = true} : vector<64x1xf32> -> vector<64x1xf32>
    %68 = vector.broadcast %67 : vector<64x1xf32> to vector<64x16xf32>
    %69 = arith.mulf %66, %68 : vector<64x16xf32>
    %70 = vector.extract_strided_slice %8 {offsets = [0, 16], sizes = [64, 16], strides = [1, 1]} : vector<64x32xf32> to vector<64x16xf32>
    %71 = arith.addf %69, %70 : vector<64x16xf32>
    %72 = vector.extract_strided_slice %13 {offsets = [0, 16], sizes = [1, 16], strides = [1, 1]} : vector<1x32xf32> to vector<1x16xf32>
    %73 = vector.broadcast %72 : vector<1x16xf32> to vector<64x16xf32>
    %74 = arith.addf %71, %73 : vector<64x16xf32>
    %75 = tpu.concatenate %44, %74 in 1 : vector<64x16xf32>, vector<64x16xf32> -> vector<64x32xf32>
    %cst_29 = arith.constant 0.000000e+00 : f32
    %76 = vector.broadcast %cst_29 : f32 to vector<64x32xf32>
    %77 = arith.cmpf ogt, %75, %76 : vector<64x32xf32>
    %cst_30 = arith.constant 0.000000e+00 : f32
    %78 = vector.broadcast %cst_30 : f32 to vector<64x32xf32>
    %79 = arith.minimumf %75, %78 : vector<64x32xf32>
    %80 = math.exp %79 : vector<64x32xf32>
    %cst_31 = arith.constant 1.000000e+00 : f32
    %81 = vector.broadcast %cst_31 : f32 to vector<64x32xf32>
    %82 = arith.subf %80, %81 : vector<64x32xf32>
    %83 = arith.select %77, %75, %82 : vector<64x32xi1>, vector<64x32xf32>
    %84 = arith.truncf %83 : vector<64x32xf32> to vector<64x32xbf16>
    %c0_32 = arith.constant 0 : index
    %c0_33 = arith.constant 0 : index
    %85 = vector.load %arg7[%c0_32, %c0_33] : memref<32x32xbf16, #tpu.memory_space<vmem>>, vector<32x32xbf16>
    %cst_34 = arith.constant dense<0.000000e+00> : vector<64x32xf32>
    %86 = tpu.matmul %84, %85, %cst_34 {dimension_numbers = #tpu.dot_dimension_numbers<[1], [0], [0], [1], [0, 0, 1, 1], [], []>} : vector<64x32xbf16>, vector<32x32xbf16>, vector<64x32xf32> -> vector<64x32xf32>
    %c0_35 = arith.constant 0 : index
    %c0_36 = arith.constant 0 : index
    %87 = vector.load %arg9[%c0_35, %c0_36] : memref<32x2xf32, #tpu.memory_space<vmem>>, vector<32x2xf32>
    %cst_37 = arith.constant dense<0.000000e+00> : vector<64x2xf32>
    %88 = tpu.matmul %86, %87, %cst_37 {dimension_numbers = #tpu.dot_dimension_numbers<[1], [0], [0], [1], [0, 0, 1, 1], [], []>} : vector<64x32xf32>, vector<32x2xf32>, vector<64x2xf32> -> vector<64x2xf32>
    %c0_38 = arith.constant 0 : index
    %c0_39 = arith.constant 0 : index
    %89 = vector.load %arg8[%c0_38, %c0_39] : memref<2x32xf32, #tpu.memory_space<vmem>>, vector<2x32xf32>
    %cst_40 = arith.constant dense<0.000000e+00> : vector<2x64xf32>
    %90 = tpu.matmul %89, %86, %cst_40 {dimension_numbers = #tpu.dot_dimension_numbers<[1], [1], [0], [0], [0, 0, 1, 0], [], []>} : vector<2x32xf32>, vector<64x32xf32>, vector<2x64xf32> -> vector<2x64xf32>
    %c0_41 = arith.constant 0 : index
    %c0_42 = arith.constant 0 : index
    %91 = vector.load %arg10[%c0_41, %c0_42] : memref<1x32xf32, #tpu.memory_space<vmem>>, vector<1x32xf32>
    %92 = arith.truncf %86 : vector<64x32xf32> to vector<64x32xbf16>
    %93 = vector.extract_strided_slice %88 {offsets = [0, 0], sizes = [64, 1], strides = [1, 1]} : vector<64x2xf32> to vector<64x1xf32>
    %94 = vector.extract_strided_slice %90 {offsets = [0, 0], sizes = [1, 64], strides = [1, 1]} : vector<2x64xf32> to vector<1x64xf32>
    %95 = vector.broadcast %93 : vector<64x1xf32> to vector<64x64xf32>
    %96 = vector.broadcast %94 : vector<1x64xf32> to vector<64x64xf32>
    %97 = arith.addf %95, %96 : vector<64x64xf32>
    %cst_43 = arith.constant 0.000000e+00 : f32
    %98 = vector.broadcast %cst_43 : f32 to vector<64x64xf32>
    %99 = arith.cmpf ogt, %97, %98 : vector<64x64xf32>
    %cst_44 = arith.constant 2.000000e-01 : f32
    %100 = vector.broadcast %cst_44 : f32 to vector<64x64xf32>
    %101 = arith.mulf %100, %97 : vector<64x64xf32>
    %102 = arith.select %99, %97, %101 : vector<64x64xi1>, vector<64x64xf32>
    %cst_45 = arith.constant -1.000000e+09 : f32
    %103 = vector.broadcast %cst_45 : f32 to vector<64x64xf32>
    %104 = arith.select %2, %102, %103 : vector<64x64xi1>, vector<64x64xf32>
    %cst_46 = arith.constant dense<0xFF800000> : vector<64xf32>
    %105 = vector.multi_reduction <maximumf>, %104, %cst_46 [1] : vector<64x64xf32> to vector<64xf32>
    %106 = vector.shape_cast %105 : vector<64xf32> to vector<64x1xf32>
    %107 = vector.broadcast %106 : vector<64x1xf32> to vector<64x64xf32>
    %108 = arith.subf %104, %107 : vector<64x64xf32>
    %109 = math.exp %108 : vector<64x64xf32>
    %cst_47 = arith.constant dense<0.000000e+00> : vector<64xf32>
    %110 = vector.multi_reduction <add>, %109, %cst_47 [1] : vector<64x64xf32> to vector<64xf32>
    %111 = vector.shape_cast %110 : vector<64xf32> to vector<64x1xf32>
    %112 = arith.truncf %109 : vector<64x64xf32> to vector<64x64xbf16>
    %113 = vector.extract_strided_slice %92 {offsets = [0, 0], sizes = [64, 16], strides = [1, 1]} : vector<64x32xbf16> to vector<64x16xbf16>
    %cst_48 = arith.constant dense<0.000000e+00> : vector<64x16xf32>
    %114 = tpu.matmul %112, %113, %cst_48 {dimension_numbers = #tpu.dot_dimension_numbers<[1], [0], [0], [1], [0, 0, 1, 1], [], []>} : vector<64x64xbf16>, vector<64x16xbf16>, vector<64x16xf32> -> vector<64x16xf32>
    %115 = tpu.reciprocal %111 {approx = true} : vector<64x1xf32> -> vector<64x1xf32>
    %116 = vector.broadcast %115 : vector<64x1xf32> to vector<64x16xf32>
    %117 = arith.mulf %114, %116 : vector<64x16xf32>
    %118 = vector.extract_strided_slice %83 {offsets = [0, 0], sizes = [64, 16], strides = [1, 1]} : vector<64x32xf32> to vector<64x16xf32>
    %119 = arith.addf %117, %118 : vector<64x16xf32>
    %120 = vector.extract_strided_slice %91 {offsets = [0, 0], sizes = [1, 16], strides = [1, 1]} : vector<1x32xf32> to vector<1x16xf32>
    %121 = vector.broadcast %120 : vector<1x16xf32> to vector<64x16xf32>
    %122 = arith.addf %119, %121 : vector<64x16xf32>
    %123 = vector.extract_strided_slice %88 {offsets = [0, 1], sizes = [64, 1], strides = [1, 1]} : vector<64x2xf32> to vector<64x1xf32>
    %124 = vector.extract_strided_slice %90 {offsets = [1, 0], sizes = [1, 64], strides = [1, 1]} : vector<2x64xf32> to vector<1x64xf32>
    %125 = vector.broadcast %123 : vector<64x1xf32> to vector<64x64xf32>
    %126 = vector.broadcast %124 : vector<1x64xf32> to vector<64x64xf32>
    %127 = arith.addf %125, %126 : vector<64x64xf32>
    %cst_49 = arith.constant 0.000000e+00 : f32
    %128 = vector.broadcast %cst_49 : f32 to vector<64x64xf32>
    %129 = arith.cmpf ogt, %127, %128 : vector<64x64xf32>
    %cst_50 = arith.constant 2.000000e-01 : f32
    %130 = vector.broadcast %cst_50 : f32 to vector<64x64xf32>
    %131 = arith.mulf %130, %127 : vector<64x64xf32>
    %132 = arith.select %129, %127, %131 : vector<64x64xi1>, vector<64x64xf32>
    %cst_51 = arith.constant -1.000000e+09 : f32
    %133 = vector.broadcast %cst_51 : f32 to vector<64x64xf32>
    %134 = arith.select %2, %132, %133 : vector<64x64xi1>, vector<64x64xf32>
    %cst_52 = arith.constant dense<0xFF800000> : vector<64xf32>
    %135 = vector.multi_reduction <maximumf>, %134, %cst_52 [1] : vector<64x64xf32> to vector<64xf32>
    %136 = vector.shape_cast %135 : vector<64xf32> to vector<64x1xf32>
    %137 = vector.broadcast %136 : vector<64x1xf32> to vector<64x64xf32>
    %138 = arith.subf %134, %137 : vector<64x64xf32>
    %139 = math.exp %138 : vector<64x64xf32>
    %cst_53 = arith.constant dense<0.000000e+00> : vector<64xf32>
    %140 = vector.multi_reduction <add>, %139, %cst_53 [1] : vector<64x64xf32> to vector<64xf32>
    %141 = vector.shape_cast %140 : vector<64xf32> to vector<64x1xf32>
    %142 = arith.truncf %139 : vector<64x64xf32> to vector<64x64xbf16>
    %143 = vector.extract_strided_slice %92 {offsets = [0, 16], sizes = [64, 16], strides = [1, 1]} : vector<64x32xbf16> to vector<64x16xbf16>
    %cst_54 = arith.constant dense<0.000000e+00> : vector<64x16xf32>
    %144 = tpu.matmul %142, %143, %cst_54 {dimension_numbers = #tpu.dot_dimension_numbers<[1], [0], [0], [1], [0, 0, 1, 1], [], []>} : vector<64x64xbf16>, vector<64x16xbf16>, vector<64x16xf32> -> vector<64x16xf32>
    %145 = tpu.reciprocal %141 {approx = true} : vector<64x1xf32> -> vector<64x1xf32>
    %146 = vector.broadcast %145 : vector<64x1xf32> to vector<64x16xf32>
    %147 = arith.mulf %144, %146 : vector<64x16xf32>
    %148 = vector.extract_strided_slice %83 {offsets = [0, 16], sizes = [64, 16], strides = [1, 1]} : vector<64x32xf32> to vector<64x16xf32>
    %149 = arith.addf %147, %148 : vector<64x16xf32>
    %150 = vector.extract_strided_slice %91 {offsets = [0, 16], sizes = [1, 16], strides = [1, 1]} : vector<1x32xf32> to vector<1x16xf32>
    %151 = vector.broadcast %150 : vector<1x16xf32> to vector<64x16xf32>
    %152 = arith.addf %149, %151 : vector<64x16xf32>
    %153 = tpu.concatenate %122, %152 in 1 : vector<64x16xf32>, vector<64x16xf32> -> vector<64x32xf32>
    %cst_55 = arith.constant 0.000000e+00 : f32
    %154 = vector.broadcast %cst_55 : f32 to vector<64x32xf32>
    %155 = arith.cmpf ogt, %153, %154 : vector<64x32xf32>
    %cst_56 = arith.constant 0.000000e+00 : f32
    %156 = vector.broadcast %cst_56 : f32 to vector<64x32xf32>
    %157 = arith.minimumf %153, %156 : vector<64x32xf32>
    %158 = math.exp %157 : vector<64x32xf32>
    %cst_57 = arith.constant 1.000000e+00 : f32
    %159 = vector.broadcast %cst_57 : f32 to vector<64x32xf32>
    %160 = arith.subf %158, %159 : vector<64x32xf32>
    %161 = arith.select %155, %153, %160 : vector<64x32xi1>, vector<64x32xf32>
    %cst_58 = arith.constant dense<0.000000e+00> : vector<32xf32>
    %162 = vector.multi_reduction <add>, %161, %cst_58 [0] : vector<64x32xf32> to vector<32xf32>
    %163 = vector.shape_cast %162 : vector<32xf32> to vector<1x32xf32>
    %cst_59 = arith.constant 1.562500e-02 : f32
    %164 = vector.broadcast %cst_59 : f32 to vector<1x32xf32>
    %165 = arith.mulf %163, %164 : vector<1x32xf32>
    %166 = arith.mulf %161, %161 : vector<64x32xf32>
    %cst_60 = arith.constant dense<0.000000e+00> : vector<32xf32>
    %167 = vector.multi_reduction <add>, %166, %cst_60 [0] : vector<64x32xf32> to vector<32xf32>
    %168 = vector.shape_cast %167 : vector<32xf32> to vector<1x32xf32>
    %cst_61 = arith.constant 1.562500e-02 : f32
    %169 = vector.broadcast %cst_61 : f32 to vector<1x32xf32>
    %170 = arith.mulf %168, %169 : vector<1x32xf32>
    %171 = arith.mulf %165, %165 : vector<1x32xf32>
    %172 = arith.subf %170, %171 : vector<1x32xf32>
    %cst_62 = arith.constant 9.99999974E-6 : f32
    %173 = vector.broadcast %cst_62 : f32 to vector<1x32xf32>
    %174 = arith.addf %172, %173 : vector<1x32xf32>
    %175 = math.rsqrt %174 : vector<1x32xf32>
    %176 = vector.broadcast %165 : vector<1x32xf32> to vector<64x32xf32>
    %177 = arith.subf %161, %176 : vector<64x32xf32>
    %178 = vector.broadcast %175 : vector<1x32xf32> to vector<64x32xf32>
    %179 = arith.mulf %177, %178 : vector<64x32xf32>
    %c0_63 = arith.constant 0 : index
    %c0_64 = arith.constant 0 : index
    %180 = vector.load %arg11[%c0_63, %c0_64] : memref<1x32xf32, #tpu.memory_space<vmem>>, vector<1x32xf32>
    %181 = vector.broadcast %180 : vector<1x32xf32> to vector<64x32xf32>
    %182 = arith.mulf %179, %181 : vector<64x32xf32>
    %c0_65 = arith.constant 0 : index
    %c0_66 = arith.constant 0 : index
    %183 = vector.load %arg12[%c0_65, %c0_66] : memref<1x32xf32, #tpu.memory_space<vmem>>, vector<1x32xf32>
    %184 = vector.broadcast %183 : vector<1x32xf32> to vector<64x32xf32>
    %185 = arith.addf %182, %184 : vector<64x32xf32>
    %186 = arith.truncf %185 : vector<64x32xf32> to vector<64x32xbf16>
    %c0_67 = arith.constant 0 : index
    %c0_68 = arith.constant 0 : index
    %187 = vector.load %arg13[%c0_67, %c0_68] : memref<32x4xbf16, #tpu.memory_space<vmem>>, vector<32x4xbf16>
    %cst_69 = arith.constant dense<0.000000e+00> : vector<64x4xf32>
    %188 = tpu.matmul %186, %187, %cst_69 {dimension_numbers = #tpu.dot_dimension_numbers<[1], [0], [0], [1], [0, 0, 1, 1], [], []>} : vector<64x32xbf16>, vector<32x4xbf16>, vector<64x4xf32> -> vector<64x4xf32>
    %c0_70 = arith.constant 0 : index
    %c0_71 = arith.constant 0 : index
    %189 = vector.load %arg14[%c0_70, %c0_71] : memref<1x4xf32, #tpu.memory_space<vmem>>, vector<1x4xf32>
    %190 = vector.broadcast %189 : vector<1x4xf32> to vector<64x4xf32>
    %191 = arith.addf %188, %190 : vector<64x4xf32>
    %c0_72 = arith.constant 0 : index
    %c0_73 = arith.constant 0 : index
    %192 = vector.load %arg15[%c0_72, %c0_73] : memref<64x4xf32, #tpu.memory_space<vmem>>, vector<64x4xf32>
    tpu.vector_store %arg15[%c0_72, %c0_73], %191 {strides = array<i32>} : memref<64x4xf32, #tpu.memory_space<vmem>>, vector<64x4xf32>,
    return
  }
}

</mosaic_0001>

<llo_original>
// kernel: gat_contrastive_forward.1
$region0: #{gat_contrastive_forward.1}
  #allocation0 [shape = 'u32[]', space=smem, size = 0x4, offset = 0x4, fixed_abs, tag = 'smem constant byte address 0x4 - core index']
  #allocation1 [shape = 'u32[144,128]{1,0:T(1,128)}', space=vmem, size = 0x12000, scoped, tag = 'internal scratch']
  %s0 = inlined_call_operand.vmem [shape: f32[64,48], index: 0, kind: input, shape index: {}]
  %s1 = inlined_call_operand.vmem [shape: bf16[64,64], index: 1, kind: input, shape index: {}]
  %s2 = inlined_call_operand.vmem [shape: bf16[48,32], index: 2, kind: input, shape index: {}]
  %s3 = inlined_call_operand.vmem [shape: f32[2,32], index: 3, kind: input, shape index: {}]
  %s4 = inlined_call_operand.vmem [shape: f32[32,2], index: 4, kind: input, shape index: {}]
  %s5 = inlined_call_operand.vmem [shape: f32[1,32], index: 5, kind: input, shape index: {}]
  %s6 = inlined_call_operand.vmem [shape: bf16[48,32], index: 6, kind: input, shape index: {}]
  %s7 = inlined_call_operand.vmem [shape: bf16[32,32], index: 7, kind: input, shape index: {}]
  %s8 = inlined_call_operand.vmem [shape: f32[2,32], index: 8, kind: input, shape index: {}]
  %s9 = inlined_call_operand.vmem [shape: f32[32,2], index: 9, kind: input, shape index: {}]
  %s10 = inlined_call_operand.vmem [shape: f32[1,32], index: 10, kind: input, shape index: {}]
  %s11 = inlined_call_operand.vmem [shape: f32[1,32], index: 11, kind: input, shape index: {}]
  %s12 = inlined_call_operand.vmem [shape: f32[1,32], index: 12, kind: input, shape index: {}]
  %s13 = inlined_call_operand.vmem [shape: bf16[32,4], index: 13, kind: input, shape index: {}]
  %s14 = inlined_call_operand.vmem [shape: f32[1,4], index: 14, kind: input, shape index: {}]
  %s15 = inlined_call_operand.vmem [shape: f32[64,4], index: 15, kind: output, shape index: {}]
  %s16 = sld [smem:[#allocation0]]
  $region70: #{gat_contrastive_forward.1} parent=0
    _
  %s18 = ssub.s32 1, %s16
  %s19 = scalar_select 0, %s18, %s16
  // Predicated region
  $region2: #{gat_contrastive_forward.1} parent=0 // pred_check
    _
  $region3: #{gat_contrastive_forward.1} parent=0 // pred_check_branch
    %21 = sbr.rel (0) target = $region5
  $region4: #{gat_contrastive_forward.1} parent=0 // pred_region
    _
  $region5: #{gat_contrastive_forward.1} parent=0 // pred_fallthru
    _
  // Predicated region
  $region6: #{gat_contrastive_forward.1} parent=0 // pred_check
    _
  $region7: #{gat_contrastive_forward.1} parent=0 // pred_check_branch
    %23 = sbr.rel (0) target = $region9
  $region8: #{gat_contrastive_forward.1} parent=0 // pred_region
    _
  $region9: #{gat_contrastive_forward.1} parent=0 // pred_fallthru
    _
  // Predicated region
  $region10: #{gat_contrastive_forward.1} parent=0 // pred_check
    _
  $region11: #{gat_contrastive_forward.1} parent=0 // pred_check_branch
    %25 = sbr.rel (0) target = $region13
  $region12: #{gat_contrastive_forward.1} parent=0 // pred_region
    _
  $region13: #{gat_contrastive_forward.1} parent=0 // pred_fallthru
    _
  // Predicated region
  $region14: #{gat_contrastive_forward.1} parent=0 // pred_check
    _
  $region15: #{gat_contrastive_forward.1} parent=0 // pred_check_branch
    %27 = sbr.rel (0) target = $region17
  $region16: #{gat_contrastive_forward.1} parent=0 // pred_region
    _
  $region17: #{gat_contrastive_forward.1} parent=0 // pred_fallthru
    _
  // Predicated region
  $region18: #{gat_contrastive_forward.1} parent=0 // pred_check
    _
  $region19: #{gat_contrastive_forward.1} parent=0 // pred_check_branch
    %29 = sbr.rel (0) target = $region21
  $region20: #{gat_contrastive_forward.1} parent=0 // pred_region
    _
  $region21: #{gat_contrastive_forward.1} parent=0 // pred_fallthru
    _
  // Predicated region
  $region22: #{gat_contrastive_forward.1} parent=0 // pred_check
    _
  $region23: #{gat_contrastive_forward.1} parent=0 // pred_check_branch
    %31 = sbr.rel (0) target = $region25
  $region24: #{gat_contrastive_forward.1} parent=0 // pred_region
    _
  $region25: #{gat_contrastive_forward.1} parent=0 // pred_fallthru
    _
  // Predicated region
  $region26: #{gat_contrastive_forward.1} parent=0 // pred_check
    _
  $region27: #{gat_contrastive_forward.1} parent=0 // pred_check_branch
    %33 = sbr.rel (0) target = $region29
  $region28: #{gat_contrastive_forward.1} parent=0 // pred_region
    _
  $region29: #{gat_contrastive_forward.1} parent=0 // pred_fallthru
    _
  // Predicated region
  $region30: #{gat_contrastive_forward.1} parent=0 // pred_check
    _
  $region31: #{gat_contrastive_forward.1} parent=0 // pred_check_branch
    %35 = sbr.rel (0) target = $region33
  $region32: #{gat_contrastive_forward.1} parent=0 // pred_region
    _
  $region33: #{gat_contrastive_forward.1} parent=0 // pred_fallthru
    _
  // Predicated region
  $region34: #{gat_contrastive_forward.1} parent=0 // pred_check
    _
  $region35: #{gat_contrastive_forward.1} parent=0 // pred_check_branch
    %37 = sbr.rel (0) target = $region37
  $region36: #{gat_contrastive_forward.1} parent=0 // pred_region
    _
  $region37: #{gat_contrastive_forward.1} parent=0 // pred_fallthru
    _
  // Predicated region
  $region38: #{gat_contrastive_forward.1} parent=0 // pred_check
    _
  $region39: #{gat_contrastive_forward.1} parent=0 // pred_check_branch
    %39 = sbr.rel (0) target = $region41
  $region40: #{gat_contrastive_forward.1} parent=0 // pred_region
    _
  $region41: #{gat_contrastive_forward.1} parent=0 // pred_fallthru
    _
  // Predicated region
  $region42: #{gat_contrastive_forward.1} parent=0 // pred_check
    _
  $region43: #{gat_contrastive_forward.1} parent=0 // pred_check_branch
    %41 = sbr.rel (0) target = $region45
  $region44: #{gat_contrastive_forward.1} parent=0 // pred_region
    _
  $region45: #{gat_contrastive_forward.1} parent=0 // pred_fallthru
    _
  // Predicated region
  $region46: #{gat_contrastive_forward.1} parent=0 // pred_check
    _
  $region47: #{gat_contrastive_forward.1} parent=0 // pred_check_branch
    %43 = sbr.rel (0) target = $region49
  $region48: #{gat_contrastive_forward.1} parent=0 // pred_region
    _
  $region49: #{gat_contrastive_forward.1} parent=0 // pred_fallthru
    _
  // Predicated region
  $region50: #{gat_contrastive_forward.1} parent=0 // pred_check
    _
  $region51: #{gat_contrastive_forward.1} parent=0 // pred_check_branch
    %45 = sbr.rel (0) target = $region53
  $region52: #{gat_contrastive_forward.1} parent=0 // pred_region
    _
  $region53: #{gat_contrastive_forward.1} parent=0 // pred_fallthru
    _
  // Predicated region
  $region54: #{gat_contrastive_forward.1} parent=0 // pred_check
    _
  $region55: #{gat_contrastive_forward.1} parent=0 // pred_check_branch
    %47 = sbr.rel (0) target = $region57
  $region56: #{gat_contrastive_forward.1} parent=0 // pred_region
    _
  $region57: #{gat_contrastive_forward.1} parent=0 // pred_fallthru
    _
  // Predicated region
  $region58: #{gat_contrastive_forward.1} parent=0 // pred_check
    _
  $region59: #{gat_contrastive_forward.1} parent=0 // pred_check_branch
    %49 = sbr.rel (0) target = $region61
  $region60: #{gat_contrastive_forward.1} parent=0 // pred_region
    _
  $region61: #{gat_contrastive_forward.1} parent=0 // pred_fallthru
    _
  %v53 = vld [vmem:[%s1] sm:$0xf]
  %v54 = vld [vmem:[%s1 + $0x4] sm:$0xf]
  %v55 = vld [vmem:[%s1 + $0x8] sm:$0xf]
  %v56 = vld [vmem:[%s1 + $0xc] sm:$0xf]
  %v57 = vld [vmem:[%s1 + $0x10] sm:$0xf]
  %v58 = vld [vmem:[%s1 + $0x14] sm:$0xf]
  %v59 = vld [vmem:[%s1 + $0x18] sm:$0xf]
  %v60 = vld [vmem:[%s1 + $0x1c] sm:$0xf]
  %vm61 = vcmp.gt.bf16.partialorder %v53, 0
  %vm62 = vcmp.gt.bf16.partialorder %v54, 0
  %vm63 = vcmp.gt.bf16.partialorder %v55, 0
  %vm64 = vcmp.gt.bf16.partialorder %v56, 0
  %vm65 = vcmp.gt.bf16.partialorder %v57, 0
  %vm66 = vcmp.gt.bf16.partialorder %v58, 0
  %vm67 = vcmp.gt.bf16.partialorder %v59, 0
  %vm68 = vcmp.gt.bf16.partialorder %v60, 0
  %v69 = vld [vmem:[%s0] sm:$0xff]
  %v70 = vld [vmem:[%s0 + $0x8] sm:$0xff]
  %v71 = vld [vmem:[%s0 + $0x10] sm:$0xff]
  %v72 = vld [vmem:[%s0 + $0x18] sm:$0xff]
  %v73 = vld [vmem:[%s0 + $0x20] sm:$0xff]
  %v74 = vld [vmem:[%s0 + $0x28] sm:$0xff]
  %v75 = vld [vmem:[%s0 + $0x30] sm:$0xff]
  %v76 = vld [vmem:[%s0 + $0x38] sm:$0xff]
  %v77 = vpack.c.bf16 %v70, %v69
  %v78 = vpack.c.bf16 %v72, %v71
  %v79 = vpack.c.bf16 %v74, %v73
  %v80 = vpack.c.bf16 %v76, %v75
  %v81 = vld [vmem:[%s2] sm:$0xf]
  %v82 = vld [vmem:[%s2 + $0x4] sm:$0xf]
  %v83 = vld [vmem:[%s2 + $0x8] sm:$0xf]
  %v84 = vld [vmem:[%s2 + $0xc] sm:$0xf]
  %v85 = vld [vmem:[%s2 + $0x10] sm:$0xf]
  %v86 = vld [vmem:[%s2 + $0x14] sm:$0xf]
  %v93 = vunpack.c.l.b16 %v81
  %v94 = vunpack.c.l.b16 %v82
  %v95 = vunpack.c.l.b16 %v83
  %v96 = vunpack.c.l.b16 %v84
  %v97 = vunpack.c.l.b16 %v85
  %v98 = vunpack.c.l.b16 %v86
  %v99 = vpack.c.b16 %v94, %v93
  %v100 = vpack.c.b16 %v96, %v95
  %v101 = vpack.c.b16 %v98, %v97
  %vm105 = vcmask 392192
  %v107 = vsel %vm105, %v77, 0
  %v110 = vsel %vm105, %v78, 0
  %v113 = vsel %vm105, %v79, 0
  %v116 = vsel %vm105, %v80, 0
  %118 = vmatprep.subr.bf16.mxu0 0
  %119 = vmatpush1.bf16.msra.mxu0 %v99
  %120 = vmatprep.subr.bf16.mxu0 0
  %121 = vmatpush1.bf16.msra.mxu0 %v100
  %122 = vmatprep.subr.bf16.mxu0 0
  %123 = vmatpush1.bf16.msra.mxu0 %v101
  %124 = vmatprep.subr.bf16.mxu0 0
  %125 = vmatpush1.bf16.msra.mxu0 0
  %126 = vmatprep.subr.bf16.mxu0 0
  %127 = vmatpush1.bf16.msra.mxu0 0
  %128 = vmatprep.subr.bf16.mxu0 0
  %129 = vmatpush1.bf16.msra.mxu0 0
  %130 = vmatprep.subr.bf16.mxu0 0
  %131 = vmatpush1.bf16.msra.mxu0 0
  %132 = vmatprep.subr.bf16.mxu0 0
  %133 = vmatpush1.bf16.msra.mxu0 0
  %134 = vmatprep.subr.bf16.mxu0 0
  %135 = vmatpush1.bf16.msra.mxu0 0
  %136 = vmatprep.subr.bf16.mxu0 0
  %137 = vmatpush1.bf16.msra.mxu0 0
  %138 = vmatprep.subr.bf16.mxu0 0
  %139 = vmatpush1.bf16.msra.mxu0 0
  %140 = vmatprep.subr.bf16.mxu0 0
  %141 = vmatpush1.bf16.msra.mxu0 0
  %142 = vmatprep.subr.bf16.mxu0 0
  %143 = vmatpush1.bf16.msra.mxu0 0
  %144 = vmatprep.subr.bf16.mxu0 0
  %145 = vmatpush1.bf16.msra.mxu0 0
  %146 = vmatprep.subr.bf16.mxu0 0
  %147 = vmatpush1.bf16.msra.mxu0 0
  %148 = vmatprep.subr.bf16.mxu0 0
  %149 = vmatpush1.bf16.msra.mxu0 0
  %150 = vmatprep.mubr.bf16.mxu0 0
  %151 = vmatmul.mubr.bf16.gmra.mrb[0].mxu0 %v107
  %v152 = vpop.f32.mrb[0].mxu0
  %v153 = vadd.f32 0.0, %v152
  %v154 = vpop.f32.mrb[0].mxu0
  %v155 = vpop.f32.mrb[0].mxu0
  %v156 = vadd.f32 0.0, %v155
  %v157 = vpop.f32.mrb[0].mxu0
  %158 = vmatprep.mubr.bf16.mxu0 0
  %159 = vmatmul.mubr.bf16.gmra.mrb[0].mxu0 %v110
  %v160 = vpop.f32.mrb[0].mxu0
  %v161 = vadd.f32 0.0, %v160
  %v162 = vpop.f32.mrb[0].mxu0
  %v163 = vpop.f32.mrb[0].mxu0
  %v164 = vadd.f32 0.0, %v163
  %v165 = vpop.f32.mrb[0].mxu0
  %166 = vmatprep.mubr.bf16.mxu0 0
  %167 = vmatmul.mubr.bf16.gmra.mrb[0].mxu0 %v113
  %v168 = vpop.f32.mrb[0].mxu0
  %v169 = vadd.f32 0.0, %v168
  %v170 = vpop.f32.mrb[0].mxu0
  %v171 = vpop.f32.mrb[0].mxu0
  %v172 = vadd.f32 0.0, %v171
  %v173 = vpop.f32.mrb[0].mxu0
  %174 = vmatprep.mubr.bf16.mxu0 0
  %175 = vmatmul.mubr.bf16.gmra.mrb[0].mxu0 %v116
  %v176 = vpop.f32.mrb[0].mxu0
  %v177 = vadd.f32 0.0, %v176
  %v178 = vpop.f32.mrb[0].mxu0
  %v179 = vpop.f32.mrb[0].mxu0
  %v180 = vadd.f32 0.0, %v179
  %v181 = vpop.f32.mrb[0].mxu0
  %182 = vdwg.mxu0
  %v183 = vld [vmem:[%s6] sm:$0xf]
  %v184 = vld [vmem:[%s6 + $0x4] sm:$0xf]
  %v185 = vld [vmem:[%s6 + $0x8] sm:$0xf]
  %v186 = vld [vmem:[%s6 + $0xc] sm:$0xf]
  %v187 = vld [vmem:[%s6 + $0x10] sm:$0xf]
  %v188 = vld [vmem:[%s6 + $0x14] sm:$0xf]
  %v195 = vunpack.c.l.b16 %v183
  %v196 = vunpack.c.l.b16 %v184
  %v197 = vunpack.c.l.b16 %v185
  %v198 = vunpack.c.l.b16 %v186
  %v199 = vunpack.c.l.b16 %v187
  %v200 = vunpack.c.l.b16 %v188
  %v201 = vpack.c.b16 %v196, %v195
  %v202 = vpack.c.b16 %v198, %v197
  %v203 = vpack.c.b16 %v200, %v199
  %207 = vmatprep.subr.bf16.mxu0 0
  %208 = vmatpush1.bf16.msra.mxu0 %v201
  %209 = vmatprep.subr.bf16.mxu0 0
  %210 = vmatpush1.bf16.msra.mxu0 %v202
  %211 = vmatprep.subr.bf16.mxu0 0
  %212 = vmatpush1.bf16.msra.mxu0 %v203
  %213 = vmatprep.subr.bf16.mxu0 0
  %214 = vmatpush1.bf16.msra.mxu0 0
  %215 = vmatprep.subr.bf16.mxu0 0
  %216 = vmatpush1.bf16.msra.mxu0 0
  %217 = vmatprep.subr.bf16.mxu0 0
  %218 = vmatpush1.bf16.msra.mxu0 0
  %219 = vmatprep.subr.bf16.mxu0 0
  %220 = vmatpush1.bf16.msra.mxu0 0
  %221 = vmatprep.subr.bf16.mxu0 0
  %222 = vmatpush1.bf16.msra.mxu0 0
  %223 = vmatprep.subr.bf16.mxu0 0
  %224 = vmatpush1.bf16.msra.mxu0 0
  %225 = vmatprep.subr.bf16.mxu0 0
  %226 = vmatpush1.bf16.msra.mxu0 0
  %227 = vmatprep.subr.bf16.mxu0 0
  %228 = vmatpush1.bf16.msra.mxu0 0
  %229 = vmatprep.subr.bf16.mxu0 0
  %230 = vmatpush1.bf16.msra.mxu0 0
  %231 = vmatprep.subr.bf16.mxu0 0
  %232 = vmatpush1.bf16.msra.mxu0 0
  %233 = vmatprep.subr.bf16.mxu0 0
  %234 = vmatpush1.bf16.msra.mxu0 0
  %235 = vmatprep.subr.bf16.mxu0 0
  %236 = vmatpush1.bf16.msra.mxu0 0
  %237 = vmatprep.subr.bf16.mxu0 0
  %238 = vmatpush1.bf16.msra.mxu0 0
  %239 = vmatprep.mubr.bf16.mxu0 0
  %240 = vmatmul.mubr.bf16.gmra.mrb[0].mxu0 %v107
  %v241 = vpop.f32.mrb[0].mxu0
  %v242 = vadd.f32 0.0, %v241
  %v243 = vpop.f32.mrb[0].mxu0
  %v244 = vpop.f32.mrb[0].mxu0
  %v245 = vadd.f32 0.0, %v244
  %v246 = vpop.f32.mrb[0].mxu0
  %247 = vmatprep.mubr.bf16.mxu0 0
  %248 = vmatmul.mubr.bf16.gmra.mrb[0].mxu0 %v110
  %v249 = vpop.f32.mrb[0].mxu0
  %v250 = vadd.f32 0.0, %v249
  %v251 = vpop.f32.mrb[0].mxu0
  %v252 = vpop.f32.mrb[0].mxu0
  %v253 = vadd.f32 0.0, %v252
  %v254 = vpop.f32.mrb[0].mxu0
  %255 = vmatprep.mubr.bf16.mxu0 0
  %256 = vmatmul.mubr.bf16.gmra.mrb[0].mxu0 %v113
  %v257 = vpop.f32.mrb[0].mxu0
  %v258 = vadd.f32 0.0, %v257
  %v259 = vpop.f32.mrb[0].mxu0
  %v260 = vpop.f32.mrb[0].mxu0
  %v261 = vadd.f32 0.0, %v260
  %v262 = vpop.f32.mrb[0].mxu0
  %263 = vmatprep.mubr.bf16.mxu0 0
  %264 = vmatmul.mubr.bf16.gmra.mrb[0].mxu0 %v116
  %v265 = vpop.f32.mrb[0].mxu0
  %v266 = vadd.f32 0.0, %v265
  %v267 = vpop.f32.mrb[0].mxu0
  %v268 = vpop.f32.mrb[0].mxu0
  %v269 = vadd.f32 0.0, %v268
  %v270 = vpop.f32.mrb[0].mxu0
  %271 = vdwg.mxu0
  %v272 = vld [vmem:[%s4] sm:$0xff]
  %v273 = vld [vmem:[%s4 + $0x8] sm:$0xff]
  %v274 = vld [vmem:[%s4 + $0x10] sm:$0xff]
  %v275 = vld [vmem:[%s4 + $0x18] sm:$0xff]
  %vm276 = vcmask 261120
  %v278 = vsel %vm276, %v153, 0
  %v281 = vsel %vm276, %v156, 0
  %v284 = vsel %vm276, %v161, 0
  %v287 = vsel %vm276, %v164, 0
  %v290 = vsel %vm276, %v169, 0
  %v293 = vsel %vm276, %v172, 0
  %v296 = vsel %vm276, %v177, 0
  %v299 = vsel %vm276, %v180, 0
  %301 = vmatprep.subr.mxu0 0.0
  %302 = vmatpush1.msra.mxu0 %v272
  %303 = vmatprep.subr.mxu0 0.0
  %304 = vmatpush1.msra.mxu0 %v273
  %305 = vmatprep.subr.mxu0 0.0
  %306 = vmatpush1.msra.mxu0 %v274
  %307 = vmatprep.subr.mxu0 0.0
  %308 = vmatpush1.msra.mxu0 %v275
  %309 = vmatprep.subr.mxu0 0.0
  %310 = vmatpush1.msra.mxu0 0.0
  %311 = vmatprep.subr.mxu0 0.0
  %312 = vmatpush1.msra.mxu0 0.0
  %313 = vmatprep.subr.mxu0 0.0
  %314 = vmatpush1.msra.mxu0 0.0
  %315 = vmatprep.subr.mxu0 0.0
  %316 = vmatpush1.msra.mxu0 0.0
  %317 = vmatprep.subr.mxu0 0.0
  %318 = vmatpush1.msra.mxu0 0.0
  %319 = vmatprep.subr.mxu0 0.0
  %320 = vmatpush1.msra.mxu0 0.0
  %321 = vmatprep.subr.mxu0 0.0
  %322 = vmatpush1.msra.mxu0 0.0
  %323 = vmatprep.subr.mxu0 0.0
  %324 = vmatpush1.msra.mxu0 0.0
  %325 = vmatprep.subr.mxu0 0.0
  %326 = vmatpush1.msra.mxu0 0.0
  %327 = vmatprep.subr.mxu0 0.0
  %328 = vmatpush1.msra.mxu0 0.0
  %329 = vmatprep.subr.mxu0 0.0
  %330 = vmatpush1.msra.mxu0 0.0
  %331 = vmatprep.subr.mxu0 0.0
  %332 = vmatpush1.msra.mxu0 0.0
  %333 = vmatprep.subr.mxu0 0.0
  %334 = vmatpush1.msra.mxu0 0.0
  %335 = vmatprep.subr.mxu0 0.0
  %336 = vmatpush1.msra.mxu0 0.0
  %337 = vmatprep.subr.mxu0 0.0
  %338 = vmatpush1.msra.mxu0 0.0
  %339 = vmatprep.subr.mxu0 0.0
  %340 = vmatpush1.msra.mxu0 0.0
  %341 = vmatprep.subr.mxu0 0.0
  %342 = vmatpush1.msra.mxu0 0.0
  %343 = vmatprep.subr.mxu0 0.0
  %344 = vmatpush1.msra.mxu0 0.0
  %345 = vmatprep.subr.mxu0 0.0
  %346 = vmatpush1.msra.mxu0 0.0
  %347 = vmatprep.subr.mxu0 0.0
  %348 = vmatpush1.msra.mxu0 0.0
  %349 = vmatprep.subr.mxu0 0.0
  %350 = vmatpush1.msra.mxu0 0.0
  %351 = vmatprep.subr.mxu0 0.0
  %352 = vmatpush1.msra.mxu0 0.0
  %353 = vmatprep.subr.mxu0 0.0
  %354 = vmatpush1.msra.mxu0 0.0
  %355 = vmatprep.subr.mxu0 0.0
  %356 = vmatpush1.msra.mxu0 0.0
  %357 = vmatprep.subr.mxu0 0.0
  %358 = vmatpush1.msra.mxu0 0.0
  %359 = vmatprep.subr.mxu0 0.0
  %360 = vmatpush1.msra.mxu0 0.0
  %361 = vmatprep.subr.mxu0 0.0
  %362 = vmatpush1.msra.mxu0 0.0
  %363 = vmatprep.subr.mxu0 0.0
  %364 = vmatpush1.msra.mxu0 0.0
  %365 = vmatprep.mubr.f32.mxu0 0.0
  %366 = vmatmul.mubr.f32.gmra.mrb[0].mxu0 %v278
  %v367 = vpop.f32.mrb[0].mxu0
  %v368 = vadd.f32 0.0, %v367
  %v369 = vpop.f32.mrb[0].mxu0
  %370 = vmatprep.mubr.f32.mxu0 0.0
  %371 = vmatmul.mubr.f32.gmra.mrb[0].mxu0 %v281
  %v372 = vpop.f32.mrb[0].mxu0
  %v373 = vadd.f32 0.0, %v372
  %v374 = vpop.f32.mrb[0].mxu0
  %375 = vmatprep.mubr.f32.mxu0 0.0
  %376 = vmatmul.mubr.f32.gmra.mrb[0].mxu0 %v284
  %v377 = vpop.f32.mrb[0].mxu0
  %v378 = vadd.f32 0.0, %v377
  %v379 = vpop.f32.mrb[0].mxu0
  %380 = vmatprep.mubr.f32.mxu0 0.0
  %381 = vmatmul.mubr.f32.gmra.mrb[0].mxu0 %v287
  %v382 = vpop.f32.mrb[0].mxu0
  %v383 = vadd.f32 0.0, %v382
  %v384 = vpop.f32.mrb[0].mxu0
  %385 = vmatprep.mubr.f32.mxu0 0.0
  %386 = vmatmul.mubr.f32.gmra.mrb[0].mxu0 %v290
  %v387 = vpop.f32.mrb[0].mxu0
  %v388 = vadd.f32 0.0, %v387
  %v389 = vpop.f32.mrb[0].mxu0
  %390 = vmatprep.mubr.f32.mxu0 0.0
  %391 = vmatmul.mubr.f32.gmra.mrb[0].mxu0 %v293
  %v392 = vpop.f32.mrb[0].mxu0
  %v393 = vadd.f32 0.0, %v392
  %v394 = vpop.f32.mrb[0].mxu0
  %395 = vmatprep.mubr.f32.mxu0 0.0
  %396 = vmatmul.mubr.f32.gmra.mrb[0].mxu0 %v296
  %v397 = vpop.f32.mrb[0].mxu0
  %v398 = vadd.f32 0.0, %v397
  %v399 = vpop.f32.mrb[0].mxu0
  %400 = vmatprep.mubr.f32.mxu0 0.0
  %401 = vmatmul.mubr.f32.gmra.mrb[0].mxu0 %v299
  %v402 = vpop.f32.mrb[0].mxu0
  %v403 = vadd.f32 0.0, %v402
  %v404 = vpop.f32.mrb[0].mxu0
  %405 = vdwg.mxu0
  %v406 = vld [vmem:[%s3] sm:$0x3]
  %v408 = vsel %vm276, %v406, 0
  %410 = vmatprep.subr.mxu0 0.0
  %411 = vmatpush1.xpose.msra.mxu0 %v278
  %412 = vmatprep.subr.mxu0 0.0
  %413 = vmatpush1.xpose.msra.mxu0 %v281
  %414 = vmatprep.subr.mxu0 0.0
  %415 = vmatpush1.xpose.msra.mxu0 %v284
  %416 = vmatprep.subr.mxu0 0.0
  %417 = vmatpush1.xpose.msra.mxu0 %v287
  %418 = vmatprep.subr.mxu0 0.0
  %419 = vmatpush1.xpose.msra.mxu0 %v290
  %420 = vmatprep.subr.mxu0 0.0
  %421 = vmatpush1.xpose.msra.mxu0 %v293
  %422 = vmatprep.subr.mxu0 0.0
  %423 = vmatpush1.xpose.msra.mxu0 %v296
  %424 = vmatprep.subr.mxu0 0.0
  %425 = vmatpush1.xpose.msra.mxu0 %v299
  %426 = vmatprep.subr.mxu0 0.0
  %427 = vmatpush1.xpose.msra.mxu0 0.0
  %428 = vmatprep.subr.mxu0 0.0
  %429 = vmatpush1.xpose.msra.mxu0 0.0
  %430 = vmatprep.subr.mxu0 0.0
  %431 = vmatpush1.xpose.msra.mxu0 0.0
  %432 = vmatprep.subr.mxu0 0.0
  %433 = vmatpush1.xpose.msra.mxu0 0.0
  %434 = vmatprep.subr.mxu0 0.0
  %435 = vmatpush1.xpose.msra.mxu0 0.0
  %436 = vmatprep.subr.mxu0 0.0
  %437 = vmatpush1.xpose.msra.mxu0 0.0
  %438 = vmatprep.subr.mxu0 0.0
  %439 = vmatpush1.xpose.msra.mxu0 0.0
  %440 = vmatprep.subr.mxu0 0.0
  %441 = vmatpush1.xpose.msra.mxu0 0.0
  %442 = vmatprep.subr.mxu0 0.0
  %443 = vmatpush1.xpose.msra.mxu0 0.0
  %444 = vmatprep.subr.mxu0 0.0
  %445 = vmatpush1.xpose.msra.mxu0 0.0
  %446 = vmatprep.subr.mxu0 0.0
  %447 = vmatpush1.xpose.msra.mxu0 0.0
  %448 = vmatprep.subr.mxu0 0.0
  %449 = vmatpush1.xpose.msra.mxu0 0.0
  %450 = vmatprep.subr.mxu0 0.0
  %451 = vmatpush1.xpose.msra.mxu0 0.0
  %452 = vmatprep.subr.mxu0 0.0
  %453 = vmatpush1.xpose.msra.mxu0 0.0
  %454 = vmatprep.subr.mxu0 0.0
  %455 = vmatpush1.xpose.msra.mxu0 0.0
  %456 = vmatprep.subr.mxu0 0.0
  %457 = vmatpush1.xpose.msra.mxu0 0.0
  %458 = vmatprep.subr.mxu0 0.0
  %459 = vmatpush1.xpose.msra.mxu0 0.0
  %460 = vmatprep.subr.mxu0 0.0
  %461 = vmatpush1.xpose.msra.mxu0 0.0
  %462 = vmatprep.subr.mxu0 0.0
  %463 = vmatpush1.xpose.msra.mxu0 0.0
  %464 = vmatprep.subr.mxu0 0.0
  %465 = vmatpush1.xpose.msra.mxu0 0.0
  %466 = vmatprep.subr.mxu0 0.0
  %467 = vmatpush1.xpose.msra.mxu0 0.0
  %468 = vmatprep.subr.mxu0 0.0
  %469 = vmatpush1.xpose.msra.mxu0 0.0
  %470 = vmatprep.subr.mxu0 0.0
  %471 = vmatpush1.xpose.msra.mxu0 0.0
  %472 = vmatprep.subr.mxu0 0.0
  %473 = vmatpush1.xpose.msra.mxu0 0.0
  %474 = vmatprep.mubr.f32.mxu0 0.0
  %475 = vmatmul.mubr.f32.gmra.mrb[0].mxu0 %v408
  %v476 = vpop.f32.mrb[0].mxu0
  %v477 = vadd.f32 0.0, %v476
  %v478 = vpop.f32.mrb[0].mxu0
  %479 = vdwg.mxu0
  %v480 = vld [vmem:[%s5] sm:$0x1]
  %v481 = vpack.c.bf16 %v156, %v153
  %v482 = vpack.c.bf16 %v164, %v161
  %v483 = vpack.c.bf16 %v172, %v169
  %v484 = vpack.c.bf16 %v180, %v177
  %486 = vset.pattern.permute.xlu0 0
  %487 = vperm.xlu0 %486, %v368
  %v488 = vpop.permute.xlu0 %487
  %491 = vset.pattern.permute.xlu0 0
  %492 = vperm.xlu0 %491, %v373
  %v493 = vpop.permute.xlu0 %492
  %496 = vset.pattern.permute.xlu0 0
  %497 = vperm.xlu0 %496, %v378
  %v498 = vpop.permute.xlu0 %497
  %501 = vset.pattern.permute.xlu0 0
  %502 = vperm.xlu0 %501, %v383
  %v503 = vpop.permute.xlu0 %502
  %506 = vset.pattern.permute.xlu0 0
  %507 = vperm.xlu0 %506, %v388
  %v508 = vpop.permute.xlu0 %507
  %511 = vset.pattern.permute.xlu0 0
  %512 = vperm.xlu0 %511, %v393
  %v513 = vpop.permute.xlu0 %512
  %516 = vset.pattern.permute.xlu0 0
  %517 = vperm.xlu0 %516, %v398
  %v518 = vpop.permute.xlu0 %517
  %521 = vset.pattern.permute.xlu0 0
  %522 = vperm.xlu0 %521, %v403
  %v523 = vpop.permute.xlu0 %522
  %v525 = vlaneseq
  %v526 = vshrl.u32 %v525, 7
  %v527 = vsub.s32 0, %v526
  %v528 = vrot.slane %v477, %v527
  %v529 = vadd.f32 %v488, %v528
  %v530 = vadd.f32 %v493, %v528
  %v531 = vadd.f32 %v498, %v528
  %v532 = vadd.f32 %v503, %v528
  %v533 = vadd.f32 %v508, %v528
  %v534 = vadd.f32 %v513, %v528
  %v535 = vadd.f32 %v518, %v528
  %v536 = vadd.f32 %v523, %v528
  %vm537 = vcmp.gt.f32.partialorder %v529, 0.0
  %vm538 = vcmp.gt.f32.partialorder %v530, 0.0
  %vm539 = vcmp.gt.f32.partialorder %v531, 0.0
  %vm540 = vcmp.gt.f32.partialorder %v532, 0.0
  %vm541 = vcmp.gt.f32.partialorder %v533, 0.0
  %vm542 = vcmp.gt.f32.partialorder %v534, 0.0
  %vm543 = vcmp.gt.f32.partialorder %v535, 0.0
  %vm544 = vcmp.gt.f32.partialorder %v536, 0.0
  %v545 = vmul.f32 %v529, 0.2
  %v546 = vmul.f32 %v530, 0.2
  %v547 = vmul.f32 %v531, 0.2
  %v548 = vmul.f32 %v532, 0.2
  %v549 = vmul.f32 %v533, 0.2
  %v550 = vmul.f32 %v534, 0.2
  %v551 = vmul.f32 %v535, 0.2
  %v552 = vmul.f32 %v536, 0.2
  %v553 = vsel %vm537, %v529, %v545
  %v554 = vsel %vm538, %v530, %v546
  %v555 = vsel %vm539, %v531, %v547
  %v556 = vsel %vm540, %v532, %v548
  %v557 = vsel %vm541, %v533, %v549
  %v558 = vsel %vm542, %v534, %v550
  %v559 = vsel %vm543, %v535, %v551
  %v560 = vsel %vm544, %v536, %v552
  %v561 = vsel %vm61, 65537, 0
  %v562 = vsel %vm62, 65537, 0
  %v563 = vsel %vm63, 65537, 0
  %v564 = vsel %vm64, 65537, 0
  %v565 = vsel %vm65, 65537, 0
  %v566 = vsel %vm66, 65537, 0
  %v567 = vsel %vm67, 65537, 0
  %v568 = vsel %vm68, 65537, 0
  %v569 = vunpack.c.l.b16 %v561
  %v570 = vunpack.c.l.b16 %v562
  %v571 = vunpack.c.l.b16 %v563
  %v572 = vunpack.c.l.b16 %v564
  %v573 = vunpack.c.l.b16 %v565
  %v574 = vunpack.c.l.b16 %v566
  %v575 = vunpack.c.l.b16 %v567
  %v576 = vunpack.c.l.b16 %v568
  %vm577 = vcmp.ne.s32.totalorder %v569, 0
  %vm578 = vcmp.ne.s32.totalorder %v570, 0
  %vm579 = vcmp.ne.s32.totalorder %v571, 0
  %vm580 = vcmp.ne.s32.totalorder %v572, 0
  %vm581 = vcmp.ne.s32.totalorder %v573, 0
  %vm582 = vcmp.ne.s32.totalorder %v574, 0
  %vm583 = vcmp.ne.s32.totalorder %v575, 0
  %vm584 = vcmp.ne.s32.totalorder %v576, 0
  %v585 = vsel %vm577, %v553, -1e+09
  %v586 = vsel %vm578, %v554, -1e+09
  %v587 = vsel %vm579, %v555, -1e+09
  %v588 = vsel %vm580, %v556, -1e+09
  %v589 = vsel %vm581, %v557, -1e+09
  %v590 = vsel %vm582, %v558, -1e+09
  %v591 = vsel %vm583, %v559, -1e+09
  %v592 = vsel %vm584, %v560, -1e+09
  %vm593 = vcmask 523264
  %v594 = vsel %vm593, %v585, -inf
  %595 = vmax.xlane.f32.xlu0 %v594
  %v596 = vpop.xlane.xlu0 %595
  %v597 = vsel %vm593, %v586, -inf
  %598 = vmax.xlane.f32.xlu0 %v597
  %v599 = vpop.xlane.xlu0 %598
  %v600 = vsel %vm593, %v587, -inf
  %601 = vmax.xlane.f32.xlu0 %v600
  %v602 = vpop.xlane.xlu0 %601
  %v603 = vsel %vm593, %v588, -inf
  %604 = vmax.xlane.f32.xlu0 %v603
  %v605 = vpop.xlane.xlu0 %604
  %v606 = vsel %vm593, %v589, -inf
  %607 = vmax.xlane.f32.xlu0 %v606
  %v608 = vpop.xlane.xlu0 %607
  %v609 = vsel %vm593, %v590, -inf
  %610 = vmax.xlane.f32.xlu0 %v609
  %v611 = vpop.xlane.xlu0 %610
  %v612 = vsel %vm593, %v591, -inf
  %613 = vmax.xlane.f32.xlu0 %v612
  %v614 = vpop.xlane.xlu0 %613
  %v615 = vsel %vm593, %v592, -inf
  %616 = vmax.xlane.f32.xlu0 %v615
  %v617 = vpop.xlane.xlu0 %616
  %v618 = vsub.f32 %v585, %v596
  %v619 = vsub.f32 %v586, %v599
  %v620 = vsub.f32 %v587, %v602
  %v621 = vsub.f32 %v588, %v605
  %v622 = vsub.f32 %v589, %v608
  %v623 = vsub.f32 %v590, %v611
  %v624 = vsub.f32 %v591, %v614
  %v625 = vsub.f32 %v592, %v617
  %v626 = vmul.f32 %v618, 1.442695
  %v627 = vpow.pop %v626
  %v628 = vmul.f32 %v619, 1.442695
  %v629 = vpow.pop %v628
  %v630 = vmul.f32 %v620, 1.442695
  %v631 = vpow.pop %v630
  %v632 = vmul.f32 %v621, 1.442695
  %v633 = vpow.pop %v632
  %v634 = vmul.f32 %v622, 1.442695
  %v635 = vpow.pop %v634
  %v636 = vmul.f32 %v623, 1.442695
  %v637 = vpow.pop %v636
  %v638 = vmul.f32 %v624, 1.442695
  %v639 = vpow.pop %v638
  %v640 = vmul.f32 %v625, 1.442695
  %v641 = vpow.pop %v640
  %v642 = vsel %vm593, %v627, 0.0
  %643 = vadd.xlane.f32.xlu0 %v642
  %v644 = vpop.xlane.xlu0 %643
  %v645 = vsel %vm593, %v629, 0.0
  %646 = vadd.xlane.f32.xlu0 %v645
  %v647 = vpop.xlane.xlu0 %646
  %v648 = vsel %vm593, %v631, 0.0
  %649 = vadd.xlane.f32.xlu0 %v648
  %v650 = vpop.xlane.xlu0 %649
  %v651 = vsel %vm593, %v633, 0.0
  %652 = vadd.xlane.f32.xlu0 %v651
  %v653 = vpop.xlane.xlu0 %652
  %v654 = vsel %vm593, %v635, 0.0
  %655 = vadd.xlane.f32.xlu0 %v654
  %v656 = vpop.xlane.xlu0 %655
  %v657 = vsel %vm593, %v637, 0.0
  %658 = vadd.xlane.f32.xlu0 %v657
  %v659 = vpop.xlane.xlu0 %658
  %v660 = vsel %vm593, %v639, 0.0
  %661 = vadd.xlane.f32.xlu0 %v660
  %v662 = vpop.xlane.xlu0 %661
  %v663 = vsel %vm593, %v641, 0.0
  %664 = vadd.xlane.f32.xlu0 %v663
  %v665 = vpop.xlane.xlu0 %664
  %v666 = vpack.c.bf16 %v629, %v627
  %v667 = vpack.c.bf16 %v633, %v631
  %v668 = vpack.c.bf16 %v637, %v635
  %v669 = vpack.c.bf16 %v641, %v639
  %v671 = vsel %vm593, %v666, 0
  %v674 = vsel %vm593, %v667, 0
  %v677 = vsel %vm593, %v668, 0
  %v680 = vsel %vm593, %v669, 0
  %682 = vmatprep.subr.bf16.mxu0 0
  %683 = vmatpush1.bf16.msra.mxu0 %v481
  %684 = vmatprep.subr.bf16.mxu0 0
  %685 = vmatpush1.bf16.msra.mxu0 %v482
  %686 = vmatprep.subr.bf16.mxu0 0
  %687 = vmatpush1.bf16.msra.mxu0 %v483
  %688 = vmatprep.subr.bf16.mxu0 0
  %689 = vmatpush1.bf16.msra.mxu0 %v484
  %690 = vmatprep.subr.bf16.mxu0 0
  %691 = vmatpush1.bf16.msra.mxu0 0
  %692 = vmatprep.subr.bf16.mxu0 0
  %693 = vmatpush1.bf16.msra.mxu0 0
  %694 = vmatprep.subr.bf16.mxu0 0
  %695 = vmatpush1.bf16.msra.mxu0 0
  %696 = vmatprep.subr.bf16.mxu0 0
  %697 = vmatpush1.bf16.msra.mxu0 0
  %698 = vmatprep.subr.bf16.mxu0 0
  %699 = vmatpush1.bf16.msra.mxu0 0
  %700 = vmatprep.subr.bf16.mxu0 0
  %701 = vmatpush1.bf16.msra.mxu0 0
  %702 = vmatprep.subr.bf16.mxu0 0
  %703 = vmatpush1.bf16.msra.mxu0 0
  %704 = vmatprep.subr.bf16.mxu0 0
  %705 = vmatpush1.bf16.msra.mxu0 0
  %706 = vmatprep.subr.bf16.mxu0 0
  %707 = vmatpush1.bf16.msra.mxu0 0
  %708 = vmatprep.subr.bf16.mxu0 0
  %709 = vmatpush1.bf16.msra.mxu0 0
  %710 = vmatprep.subr.bf16.mxu0 0
  %711 = vmatpush1.bf16.msra.mxu0 0
  %712 = vmatprep.subr.bf16.mxu0 0
  %713 = vmatpush1.bf16.msra.mxu0 0
  %714 = vmatprep.mubr.bf16.mxu0 0
  %715 = vmatmul.mubr.bf16.gmra.mrb[0].mxu0 %v671
  %v716 = vpop.f32.mrb[0].mxu0
  %v717 = vadd.f32 0.0, %v716
  %v718 = vpop.f32.mrb[0].mxu0
  %v719 = vpop.f32.mrb[0].mxu0
  %v720 = vadd.f32 0.0, %v719
  %v721 = vpop.f32.mrb[0].mxu0
  %722 = vmatprep.mubr.bf16.mxu0 0
  %723 = vmatmul.mubr.bf16.gmra.mrb[0].mxu0 %v674
  %v724 = vpop.f32.mrb[0].mxu0
  %v725 = vadd.f32 0.0, %v724
  %v726 = vpop.f32.mrb[0].mxu0
  %v727 = vpop.f32.mrb[0].mxu0
  %v728 = vadd.f32 0.0, %v727
  %v729 = vpop.f32.mrb[0].mxu0
  %730 = vmatprep.mubr.bf16.mxu0 0
  %731 = vmatmul.mubr.bf16.gmra.mrb[0].mxu0 %v677
  %v732 = vpop.f32.mrb[0].mxu0
  %v733 = vadd.f32 0.0, %v732
  %v734 = vpop.f32.mrb[0].mxu0
  %v735 = vpop.f32.mrb[0].mxu0
  %v736 = vadd.f32 0.0, %v735
  %v737 = vpop.f32.mrb[0].mxu0
  %738 = vmatprep.mubr.bf16.mxu0 0
  %739 = vmatmul.mubr.bf16.gmra.mrb[0].mxu0 %v680
  %v740 = vpop.f32.mrb[0].mxu0
  %v741 = vadd.f32 0.0, %v740
  %v742 = vpop.f32.mrb[0].mxu0
  %v743 = vpop.f32.mrb[0].mxu0
  %v744 = vadd.f32 0.0, %v743
  %v745 = vpop.f32.mrb[0].mxu0
  %746 = vdwg.mxu0
  %v747 = vrcp.pop %v644
  %v748 = vrcp.pop %v647
  %v749 = vrcp.pop %v650
  %v750 = vrcp.pop %v653
  %v751 = vrcp.pop %v656
  %v752 = vrcp.pop %v659
  %v753 = vrcp.pop %v662
  %v754 = vrcp.pop %v665
  %v755 = vmul.f32 %v717, %v747
  %v756 = vmul.f32 %v720, %v748
  %v757 = vmul.f32 %v725, %v749
  %v758 = vmul.f32 %v728, %v750
  %v759 = vmul.f32 %v733, %v751
  %v760 = vmul.f32 %v736, %v752
  %v761 = vmul.f32 %v741, %v753
  %v762 = vmul.f32 %v744, %v754
  %v763 = vadd.f32 %v755, %v242
  %v764 = vadd.f32 %v756, %v245
  %v765 = vadd.f32 %v757, %v250
  %v766 = vadd.f32 %v758, %v253
  %v767 = vadd.f32 %v759, %v258
  %v768 = vadd.f32 %v760, %v261
  %v769 = vadd.f32 %v761, %v266
  %v770 = vadd.f32 %v762, %v269
  %v772 = vlaneseq
  %v773 = vshrl.u32 %v772, 7
  %v774 = vsub.s32 0, %v773
  %v775 = vrot.slane %v480, %v774
  %v777 = vadd.f32 %v763, %v775
  %v778 = vadd.f32 %v764, %v775
  %v779 = vadd.f32 %v765, %v775
  %v780 = vadd.f32 %v766, %v775
  %v781 = vadd.f32 %v767, %v775
  %v782 = vadd.f32 %v768, %v775
  %v783 = vadd.f32 %v769, %v775
  %v784 = vadd.f32 %v770, %v775
  %785 = vset.pattern.permute.xlu0 1
  %786 = vperm.xlu0 %785, %v368
  %v787 = vpop.permute.xlu0 %786
  %789 = vset.pattern.permute.xlu0 1
  %790 = vperm.xlu0 %789, %v373
  %v791 = vpop.permute.xlu0 %790
  %793 = vset.pattern.permute.xlu0 1
  %794 = vperm.xlu0 %793, %v378
  %v795 = vpop.permute.xlu0 %794
  %797 = vset.pattern.permute.xlu0 1
  %798 = vperm.xlu0 %797, %v383
  %v799 = vpop.permute.xlu0 %798
  %801 = vset.pattern.permute.xlu0 1
  %802 = vperm.xlu0 %801, %v388
  %v803 = vpop.permute.xlu0 %802
  %805 = vset.pattern.permute.xlu0 1
  %806 = vperm.xlu0 %805, %v393
  %v807 = vpop.permute.xlu0 %806
  %809 = vset.pattern.permute.xlu0 1
  %810 = vperm.xlu0 %809, %v398
  %v811 = vpop.permute.xlu0 %810
  %813 = vset.pattern.permute.xlu0 1
  %814 = vperm.xlu0 %813, %v403
  %v815 = vpop.permute.xlu0 %814
  %v817 = vlaneseq
  %v818 = vshrl.u32 %v817, 7
  %v819 = vsub.s32 1, %v818
  %v820 = vrot.slane %v477, %v819
  %v821 = vadd.f32 %v787, %v820
  %v822 = vadd.f32 %v791, %v820
  %v823 = vadd.f32 %v795, %v820
  %v824 = vadd.f32 %v799, %v820
  %v825 = vadd.f32 %v803, %v820
  %v826 = vadd.f32 %v807, %v820
  %v827 = vadd.f32 %v811, %v820
  %v828 = vadd.f32 %v815, %v820
  %vm829 = vcmp.gt.f32.partialorder %v821, 0.0
  %vm830 = vcmp.gt.f32.partialorder %v822, 0.0
  %vm831 = vcmp.gt.f32.partialorder %v823, 0.0
  %vm832 = vcmp.gt.f32.partialorder %v824, 0.0
  %vm833 = vcmp.gt.f32.partialorder %v825, 0.0
  %vm834 = vcmp.gt.f32.partialorder %v826, 0.0
  %vm835 = vcmp.gt.f32.partialorder %v827, 0.0
  %vm836 = vcmp.gt.f32.partialorder %v828, 0.0
  %v837 = vmul.f32 %v821, 0.2
  %v838 = vmul.f32 %v822, 0.2
  %v839 = vmul.f32 %v823, 0.2
  %v840 = vmul.f32 %v824, 0.2
  %v841 = vmul.f32 %v825, 0.2
  %v842 = vmul.f32 %v826, 0.2
  %v843 = vmul.f32 %v827, 0.2
  %v844 = vmul.f32 %v828, 0.2
  %v845 = vsel %vm829, %v821, %v837
  %v846 = vsel %vm830, %v822, %v838
  %v847 = vsel %vm831, %v823, %v839
  %v848 = vsel %vm832, %v824, %v840
  %v849 = vsel %vm833, %v825, %v841
  %v850 = vsel %vm834, %v826, %v842
  %v851 = vsel %vm835, %v827, %v843
  %v852 = vsel %vm836, %v828, %v844
  %v853 = vsel %vm577, %v845, -1e+09
  %v854 = vsel %vm578, %v846, -1e+09
  %v855 = vsel %vm579, %v847, -1e+09
  %v856 = vsel %vm580, %v848, -1e+09
  %v857 = vsel %vm581, %v849, -1e+09
  %v858 = vsel %vm582, %v850, -1e+09
  %v859 = vsel %vm583, %v851, -1e+09
  %v860 = vsel %vm584, %v852, -1e+09
  %v861 = vsel %vm593, %v853, -inf
  %862 = vmax.xlane.f32.xlu0 %v861
  %v863 = vpop.xlane.xlu0 %862
  %v864 = vsel %vm593, %v854, -inf
  %865 = vmax.xlane.f32.xlu0 %v864
  %v866 = vpop.xlane.xlu0 %865
  %v867 = vsel %vm593, %v855, -inf
  %868 = vmax.xlane.f32.xlu0 %v867
  %v869 = vpop.xlane.xlu0 %868
  %v870 = vsel %vm593, %v856, -inf
  %871 = vmax.xlane.f32.xlu0 %v870
  %v872 = vpop.xlane.xlu0 %871
  %v873 = vsel %vm593, %v857, -inf
  %874 = vmax.xlane.f32.xlu0 %v873
  %v875 = vpop.xlane.xlu0 %874
  %v876 = vsel %vm593, %v858, -inf
  %877 = vmax.xlane.f32.xlu0 %v876
  %v878 = vpop.xlane.xlu0 %877
  %v879 = vsel %vm593, %v859, -inf
  %880 = vmax.xlane.f32.xlu0 %v879
  %v881 = vpop.xlane.xlu0 %880
  %v882 = vsel %vm593, %v860, -inf
  %883 = vmax.xlane.f32.xlu0 %v882
  %v884 = vpop.xlane.xlu0 %883
  %v885 = vsub.f32 %v853, %v863
  %v886 = vsub.f32 %v854, %v866
  %v887 = vsub.f32 %v855, %v869
  %v888 = vsub.f32 %v856, %v872
  %v889 = vsub.f32 %v857, %v875
  %v890 = vsub.f32 %v858, %v878
  %v891 = vsub.f32 %v859, %v881
  %v892 = vsub.f32 %v860, %v884
  %v893 = vmul.f32 %v885, 1.442695
  %v894 = vpow.pop %v893
  %v895 = vmul.f32 %v886, 1.442695
  %v896 = vpow.pop %v895
  %v897 = vmul.f32 %v887, 1.442695
  %v898 = vpow.pop %v897
  %v899 = vmul.f32 %v888, 1.442695
  %v900 = vpow.pop %v899
  %v901 = vmul.f32 %v889, 1.442695
  %v902 = vpow.pop %v901
  %v903 = vmul.f32 %v890, 1.442695
  %v904 = vpow.pop %v903
  %v905 = vmul.f32 %v891, 1.442695
  %v906 = vpow.pop %v905
  %v907 = vmul.f32 %v892, 1.442695
  %v908 = vpow.pop %v907
  %v909 = vsel %vm593, %v894, 0.0
  %910 = vadd.xlane.f32.xlu0 %v909
  %v911 = vpop.xlane.xlu0 %910
  %v912 = vsel %vm593, %v896, 0.0
  %913 = vadd.xlane.f32.xlu0 %v912
  %v914 = vpop.xlane.xlu0 %913
  %v915 = vsel %vm593, %v898, 0.0
  %916 = vadd.xlane.f32.xlu0 %v915
  %v917 = vpop.xlane.xlu0 %916
  %v918 = vsel %vm593, %v900, 0.0
  %919 = vadd.xlane.f32.xlu0 %v918
  %v920 = vpop.xlane.xlu0 %919
  %v921 = vsel %vm593, %v902, 0.0
  %922 = vadd.xlane.f32.xlu0 %v921
  %v923 = vpop.xlane.xlu0 %922
  %v924 = vsel %vm593, %v904, 0.0
  %925 = vadd.xlane.f32.xlu0 %v924
  %v926 = vpop.xlane.xlu0 %925
  %v927 = vsel %vm593, %v906, 0.0
  %928 = vadd.xlane.f32.xlu0 %v927
  %v929 = vpop.xlane.xlu0 %928
  %v930 = vsel %vm593, %v908, 0.0
  %931 = vadd.xlane.f32.xlu0 %v930
  %v932 = vpop.xlane.xlu0 %931
  %v933 = vpack.c.bf16 %v896, %v894
  %v934 = vpack.c.bf16 %v900, %v898
  %v935 = vpack.c.bf16 %v904, %v902
  %v936 = vpack.c.bf16 %v908, %v906
  %941 = vrot.lane.b32.xlu0 %v481, 112
  %v942 = vpop.permute.xlu0 %941
  %943 = vrot.lane.b32.xlu0 %v482, 112
  %v944 = vpop.permute.xlu0 %943
  %945 = vrot.lane.b32.xlu0 %v483, 112
  %v946 = vpop.permute.xlu0 %945
  %947 = vrot.lane.b32.xlu0 %v484, 112
  %v948 = vpop.permute.xlu0 %947
  %v954 = vsel %vm593, %v933, 0
  %v957 = vsel %vm593, %v934, 0
  %v960 = vsel %vm593, %v935, 0
  %v963 = vsel %vm593, %v936, 0
  %965 = vmatprep.subr.bf16.mxu0 0
  %966 = vmatpush1.bf16.msra.mxu0 %v942
  %967 = vmatprep.subr.bf16.mxu0 0
  %968 = vmatpush1.bf16.msra.mxu0 %v944
  %969 = vmatprep.subr.bf16.mxu0 0
  %970 = vmatpush1.bf16.msra.mxu0 %v946
  %971 = vmatprep.subr.bf16.mxu0 0
  %972 = vmatpush1.bf16.msra.mxu0 %v948
  %973 = vmatprep.subr.bf16.mxu0 0
  %974 = vmatpush1.bf16.msra.mxu0 0
  %975 = vmatprep.subr.bf16.mxu0 0
  %976 = vmatpush1.bf16.msra.mxu0 0
  %977 = vmatprep.subr.bf16.mxu0 0
  %978 = vmatpush1.bf16.msra.mxu0 0
  %979 = vmatprep.subr.bf16.mxu0 0
  %980 = vmatpush1.bf16.msra.mxu0 0
  %981 = vmatprep.subr.bf16.mxu0 0
  %982 = vmatpush1.bf16.msra.mxu0 0
  %983 = vmatprep.subr.bf16.mxu0 0
  %984 = vmatpush1.bf16.msra.mxu0 0
  %985 = vmatprep.subr.bf16.mxu0 0
  %986 = vmatpush1.bf16.msra.mxu0 0
  %987 = vmatprep.subr.bf16.mxu0 0
  %988 = vmatpush1.bf16.msra.mxu0 0
  %989 = vmatprep.subr.bf16.mxu0 0
  %990 = vmatpush1.bf16.msra.mxu0 0
  %991 = vmatprep.subr.bf16.mxu0 0
  %992 = vmatpush1.bf16.msra.mxu0 0
  %993 = vmatprep.subr.bf16.mxu0 0
  %994 = vmatpush1.bf16.msra.mxu0 0
  %995 = vmatprep.subr.bf16.mxu0 0
  %996 = vmatpush1.bf16.msra.mxu0 0
  %997 = vmatprep.mubr.bf16.mxu0 0
  %998 = vmatmul.mubr.bf16.gmra.mrb[0].mxu0 %v954
  %v999 = vpop.f32.mrb[0].mxu0
  %v1000 = vadd.f32 0.0, %v999
  %v1001 = vpop.f32.mrb[0].mxu0
  %v1002 = vpop.f32.mrb[0].mxu0
  %v1003 = vadd.f32 0.0, %v1002
  %v1004 = vpop.f32.mrb[0].mxu0
  %1005 = vmatprep.mubr.bf16.mxu0 0
  %1006 = vmatmul.mubr.bf16.gmra.mrb[0].mxu0 %v957
  %v1007 = vpop.f32.mrb[0].mxu0
  %v1008 = vadd.f32 0.0, %v1007
  %v1009 = vpop.f32.mrb[0].mxu0
  %v1010 = vpop.f32.mrb[0].mxu0
  %v1011 = vadd.f32 0.0, %v1010
  %v1012 = vpop.f32.mrb[0].mxu0
  %1013 = vmatprep.mubr.bf16.mxu0 0
  %1014 = vmatmul.mubr.bf16.gmra.mrb[0].mxu0 %v960
  %v1015 = vpop.f32.mrb[0].mxu0
  %v1016 = vadd.f32 0.0, %v1015
  %v1017 = vpop.f32.mrb[0].mxu0
  %v1018 = vpop.f32.mrb[0].mxu0
  %v1019 = vadd.f32 0.0, %v1018
  %v1020 = vpop.f32.mrb[0].mxu0
  %1021 = vmatprep.mubr.bf16.mxu0 0
  %1022 = vmatmul.mubr.bf16.gmra.mrb[0].mxu0 %v963
  %v1023 = vpop.f32.mrb[0].mxu0
  %v1024 = vadd.f32 0.0, %v1023
  %v1025 = vpop.f32.mrb[0].mxu0
  %v1026 = vpop.f32.mrb[0].mxu0
  %v1027 = vadd.f32 0.0, %v1026
  %v1028 = vpop.f32.mrb[0].mxu0
  %1029 = vdwg.mxu0
  %v1030 = vrcp.pop %v911
  %v1031 = vrcp.pop %v914
  %v1032 = vrcp.pop %v917
  %v1033 = vrcp.pop %v920
  %v1034 = vrcp.pop %v923
  %v1035 = vrcp.pop %v926
  %v1036 = vrcp.pop %v929
  %v1037 = vrcp.pop %v932
  %v1038 = vmul.f32 %v1000, %v1030
  %v1039 = vmul.f32 %v1003, %v1031
  %v1040 = vmul.f32 %v1008, %v1032
  %v1041 = vmul.f32 %v1011, %v1033
  %v1042 = vmul.f32 %v1016, %v1034
  %v1043 = vmul.f32 %v1019, %v1035
  %v1044 = vmul.f32 %v1024, %v1036
  %v1045 = vmul.f32 %v1027, %v1037
  %1054 = vrot.lane.b32.xlu0 %v242, 112
  %v1055 = vpop.permute.xlu0 %1054
  %1056 = vrot.lane.b32.xlu0 %v245, 112
  %v1057 = vpop.permute.xlu0 %1056
  %1058 = vrot.lane.b32.xlu0 %v250, 112
  %v1059 = vpop.permute.xlu0 %1058
  %1060 = vrot.lane.b32.xlu0 %v253, 112
  %v1061 = vpop.permute.xlu0 %1060
  %1062 = vrot.lane.b32.xlu0 %v258, 112
  %v1063 = vpop.permute.xlu0 %1062
  %1064 = vrot.lane.b32.xlu0 %v261, 112
  %v1065 = vpop.permute.xlu0 %1064
  %1066 = vrot.lane.b32.xlu0 %v266, 112
  %v1067 = vpop.permute.xlu0 %1066
  %1068 = vrot.lane.b32.xlu0 %v269, 112
  %v1069 = vpop.permute.xlu0 %1068
  %v1078 = vadd.f32 %v1038, %v1055
  %v1079 = vadd.f32 %v1039, %v1057
  %v1080 = vadd.f32 %v1040, %v1059
  %v1081 = vadd.f32 %v1041, %v1061
  %v1082 = vadd.f32 %v1042, %v1063
  %v1083 = vadd.f32 %v1043, %v1065
  %v1084 = vadd.f32 %v1044, %v1067
  %v1085 = vadd.f32 %v1045, %v1069
  %1086 = vrot.lane.b32.xlu0 %v775, 112
  %v1087 = vpop.permute.xlu0 %1086
  %v1089 = vadd.f32 %v1078, %v1087
  %v1090 = vadd.f32 %v1079, %v1087
  %v1091 = vadd.f32 %v1080, %v1087
  %v1092 = vadd.f32 %v1081, %v1087
  %v1093 = vadd.f32 %v1082, %v1087
  %v1094 = vadd.f32 %v1083, %v1087
  %v1095 = vadd.f32 %v1084, %v1087
  %v1096 = vadd.f32 %v1085, %v1087
  %1105 = vrot.lane.b32.xlu0 %v1089, 16
  %v1106 = vpop.permute.xlu0 %1105
  %1107 = vrot.lane.b32.xlu0 %v1090, 16
  %v1108 = vpop.permute.xlu0 %1107
  %1109 = vrot.lane.b32.xlu0 %v1091, 16
  %v1110 = vpop.permute.xlu0 %1109
  %1111 = vrot.lane.b32.xlu0 %v1092, 16
  %v1112 = vpop.permute.xlu0 %1111
  %1113 = vrot.lane.b32.xlu0 %v1093, 16
  %v1114 = vpop.permute.xlu0 %1113
  %1115 = vrot.lane.b32.xlu0 %v1094, 16
  %v1116 = vpop.permute.xlu0 %1115
  %1117 = vrot.lane.b32.xlu0 %v1095, 16
  %v1118 = vpop.permute.xlu0 %1117
  %1119 = vrot.lane.b32.xlu0 %v1096, 16
  %v1120 = vpop.permute.xlu0 %1119
  %vm1129 = vcmask 130048
  %v1130 = vsel %vm1129, %v777, %v1106
  %v1131 = vsel %vm1129, %v778, %v1108
  %v1132 = vsel %vm1129, %v779, %v1110
  %v1133 = vsel %vm1129, %v780, %v1112
  %v1134 = vsel %vm1129, %v781, %v1114
  %v1135 = vsel %vm1129, %v782, %v1116
  %v1136 = vsel %vm1129, %v783, %v1118
  %v1137 = vsel %vm1129, %v784, %v1120
  %vm1138 = vcmp.gt.f32.partialorder %v1130, 0.0
  %vm1139 = vcmp.gt.f32.partialorder %v1131, 0.0
  %vm1140 = vcmp.gt.f32.partialorder %v1132, 0.0
  %vm1141 = vcmp.gt.f32.partialorder %v1133, 0.0
  %vm1142 = vcmp.gt.f32.partialorder %v1134, 0.0
  %vm1143 = vcmp.gt.f32.partialorder %v1135, 0.0
  %vm1144 = vcmp.gt.f32.partialorder %v1136, 0.0
  %vm1145 = vcmp.gt.f32.partialorder %v1137, 0.0
  %v1146 = vmin.f32 %v1130, 0.0
  %v1147 = vmin.f32 %v1131, 0.0
  %v1148 = vmin.f32 %v1132, 0.0
  %v1149 = vmin.f32 %v1133, 0.0
  %v1150 = vmin.f32 %v1134, 0.0
  %v1151 = vmin.f32 %v1135, 0.0
  %v1152 = vmin.f32 %v1136, 0.0
  %v1153 = vmin.f32 %v1137, 0.0
  %v1154 = vmul.f32 %v1146, 1.442695
  %v1155 = vpow.pop %v1154
  %v1156 = vmul.f32 %v1147, 1.442695
  %v1157 = vpow.pop %v1156
  %v1158 = vmul.f32 %v1148, 1.442695
  %v1159 = vpow.pop %v1158
  %v1160 = vmul.f32 %v1149, 1.442695
  %v1161 = vpow.pop %v1160
  %v1162 = vmul.f32 %v1150, 1.442695
  %v1163 = vpow.pop %v1162
  %v1164 = vmul.f32 %v1151, 1.442695
  %v1165 = vpow.pop %v1164
  %v1166 = vmul.f32 %v1152, 1.442695
  %v1167 = vpow.pop %v1166
  %v1168 = vmul.f32 %v1153, 1.442695
  %v1169 = vpow.pop %v1168
  %v1170 = vsub.f32 %v1155, 1.0
  %v1171 = vsub.f32 %v1157, 1.0
  %v1172 = vsub.f32 %v1159, 1.0
  %v1173 = vsub.f32 %v1161, 1.0
  %v1174 = vsub.f32 %v1163, 1.0
  %v1175 = vsub.f32 %v1165, 1.0
  %v1176 = vsub.f32 %v1167, 1.0
  %v1177 = vsub.f32 %v1169, 1.0
  %v1178 = vsel %vm1138, %v1130, %v1170
  %v1179 = vsel %vm1139, %v1131, %v1171
  %v1180 = vsel %vm1140, %v1132, %v1172
  %v1181 = vsel %vm1141, %v1133, %v1173
  %v1182 = vsel %vm1142, %v1134, %v1174
  %v1183 = vsel %vm1143, %v1135, %v1175
  %v1184 = vsel %vm1144, %v1136, %v1176
  %v1185 = vsel %vm1145, %v1137, %v1177
  %v1186 = vpack.c.bf16 %v1179, %v1178
  %v1187 = vpack.c.bf16 %v1181, %v1180
  %v1188 = vpack.c.bf16 %v1183, %v1182
  %v1189 = vpack.c.bf16 %v1185, %v1184
  %v1190 = vld [vmem:[%s7] sm:$0xf]
  %v1191 = vld [vmem:[%s7 + $0x4] sm:$0xf]
  %v1192 = vld [vmem:[%s7 + $0x8] sm:$0xf]
  %v1193 = vld [vmem:[%s7 + $0xc] sm:$0xf]
  %v1198 = vunpack.c.l.b16 %v1190
  %v1199 = vunpack.c.l.b16 %v1191
  %v1200 = vunpack.c.l.b16 %v1192
  %v1201 = vunpack.c.l.b16 %v1193
  %v1202 = vpack.c.b16 %v1199, %v1198
  %v1203 = vpack.c.b16 %v1201, %v1200
  %v1207 = vsel %vm276, %v1186, 0
  %v1210 = vsel %vm276, %v1187, 0
  %v1213 = vsel %vm276, %v1188, 0
  %v1216 = vsel %vm276, %v1189, 0
  %1218 = vmatprep.subr.bf16.mxu0 0
  %1219 = vmatpush1.bf16.msra.mxu0 %v1202
  %1220 = vmatprep.subr.bf16.mxu0 0
  %1221 = vmatpush1.bf16.msra.mxu0 %v1203
  %1222 = vmatprep.subr.bf16.mxu0 0
  %1223 = vmatpush1.bf16.msra.mxu0 0
  %1224 = vmatprep.subr.bf16.mxu0 0
  %1225 = vmatpush1.bf16.msra.mxu0 0
  %1226 = vmatprep.subr.bf16.mxu0 0
  %1227 = vmatpush1.bf16.msra.mxu0 0
  %1228 = vmatprep.subr.bf16.mxu0 0
  %1229 = vmatpush1.bf16.msra.mxu0 0
  %1230 = vmatprep.subr.bf16.mxu0 0
  %1231 = vmatpush1.bf16.msra.mxu0 0
  %1232 = vmatprep.subr.bf16.mxu0 0
  %1233 = vmatpush1.bf16.msra.mxu0 0
  %1234 = vmatprep.subr.bf16.mxu0 0
  %1235 = vmatpush1.bf16.msra.mxu0 0
  %1236 = vmatprep.subr.bf16.mxu0 0
  %1237 = vmatpush1.bf16.msra.mxu0 0
  %1238 = vmatprep.subr.bf16.mxu0 0
  %1239 = vmatpush1.bf16.msra.mxu0 0
  %1240 = vmatprep.subr.bf16.mxu0 0
  %1241 = vmatpush1.bf16.msra.mxu0 0
  %1242 = vmatprep.subr.bf16.mxu0 0
  %1243 = vmatpush1.bf16.msra.mxu0 0
  %1244 = vmatprep.subr.bf16.mxu0 0
  %1245 = vmatpush1.bf16.msra.mxu0 0
  %1246 = vmatprep.subr.bf16.mxu0 0
  %1247 = vmatpush1.bf16.msra.mxu0 0
  %1248 = vmatprep.subr.bf16.mxu0 0
  %1249 = vmatpush1.bf16.msra.mxu0 0
  %1250 = vmatprep.mubr.bf16.mxu0 0
  %1251 = vmatmul.mubr.bf16.gmra.mrb[0].mxu0 %v1207
  %v1252 = vpop.f32.mrb[0].mxu0
  %v1253 = vadd.f32 0.0, %v1252
  %v1254 = vpop.f32.mrb[0].mxu0
  %v1255 = vpop.f32.mrb[0].mxu0
  %v1256 = vadd.f32 0.0, %v1255
  %v1257 = vpop.f32.mrb[0].mxu0
  %1258 = vmatprep.mubr.bf16.mxu0 0
  %1259 = vmatmul.mubr.bf16.gmra.mrb[0].mxu0 %v1210
  %v1260 = vpop.f32.mrb[0].mxu0
  %v1261 = vadd.f32 0.0, %v1260
  %v1262 = vpop.f32.mrb[0].mxu0
  %v1263 = vpop.f32.mrb[0].mxu0
  %v1264 = vadd.f32 0.0, %v1263
  %v1265 = vpop.f32.mrb[0].mxu0
  %1266 = vmatprep.mubr.bf16.mxu0 0
  %1267 = vmatmul.mubr.bf16.gmra.mrb[0].mxu0 %v1213
  %v1268 = vpop.f32.mrb[0].mxu0
  %v1269 = vadd.f32 0.0, %v1268
  %v1270 = vpop.f32.mrb[0].mxu0
  %v1271 = vpop.f32.mrb[0].mxu0
  %v1272 = vadd.f32 0.0, %v1271
  %v1273 = vpop.f32.mrb[0].mxu0
  %1274 = vmatprep.mubr.bf16.mxu0 0
  %1275 = vmatmul.mubr.bf16.gmra.mrb[0].mxu0 %v1216
  %v1276 = vpop.f32.mrb[0].mxu0
  %v1277 = vadd.f32 0.0, %v1276
  %v1278 = vpop.f32.mrb[0].mxu0
  %v1279 = vpop.f32.mrb[0].mxu0
  %v1280 = vadd.f32 0.0, %v1279
  %v1281 = vpop.f32.mrb[0].mxu0
  %1282 = vdwg.mxu0
  %v1283 = vld [vmem:[%s9] sm:$0xff]
  %v1284 = vld [vmem:[%s9 + $0x8] sm:$0xff]
  %v1285 = vld [vmem:[%s9 + $0x10] sm:$0xff]
  %v1286 = vld [vmem:[%s9 + $0x18] sm:$0xff]
  %v1288 = vsel %vm276, %v1253, 0
  %v1291 = vsel %vm276, %v1256, 0
  %v1294 = vsel %vm276, %v1261, 0
  %v1297 = vsel %vm276, %v1264, 0
  %v1300 = vsel %vm276, %v1269, 0
  %v1303 = vsel %vm276, %v1272, 0
  %v1306 = vsel %vm276, %v1277, 0
  %v1309 = vsel %vm276, %v1280, 0
  %1311 = vmatprep.subr.mxu0 0.0
  %1312 = vmatpush1.msra.mxu0 %v1283
  %1313 = vmatprep.subr.mxu0 0.0
  %1314 = vmatpush1.msra.mxu0 %v1284
  %1315 = vmatprep.subr.mxu0 0.0
  %1316 = vmatpush1.msra.mxu0 %v1285
  %1317 = vmatprep.subr.mxu0 0.0
  %1318 = vmatpush1.msra.mxu0 %v1286
  %1319 = vmatprep.subr.mxu0 0.0
  %1320 = vmatpush1.msra.mxu0 0.0
  %1321 = vmatprep.subr.mxu0 0.0
  %1322 = vmatpush1.msra.mxu0 0.0
  %1323 = vmatprep.subr.mxu0 0.0
  %1324 = vmatpush1.msra.mxu0 0.0
  %1325 = vmatprep.subr.mxu0 0.0
  %1326 = vmatpush1.msra.mxu0 0.0
  %1327 = vmatprep.subr.mxu0 0.0
  %1328 = vmatpush1.msra.mxu0 0.0
  %1329 = vmatprep.subr.mxu0 0.0
  %1330 = vmatpush1.msra.mxu0 0.0
  %1331 = vmatprep.subr.mxu0 0.0
  %1332 = vmatpush1.msra.mxu0 0.0
  %1333 = vmatprep.subr.mxu0 0.0
  %1334 = vmatpush1.msra.mxu0 0.0
  %1335 = vmatprep.subr.mxu0 0.0
  %1336 = vmatpush1.msra.mxu0 0.0
  %1337 = vmatprep.subr.mxu0 0.0
  %1338 = vmatpush1.msra.mxu0 0.0
  %1339 = vmatprep.subr.mxu0 0.0
  %1340 = vmatpush1.msra.mxu0 0.0
  %1341 = vmatprep.subr.mxu0 0.0
  %1342 = vmatpush1.msra.mxu0 0.0
  %1343 = vmatprep.subr.mxu0 0.0
  %1344 = vmatpush1.msra.mxu0 0.0
  %1345 = vmatprep.subr.mxu0 0.0
  %1346 = vmatpush1.msra.mxu0 0.0
  %1347 = vmatprep.subr.mxu0 0.0
  %1348 = vmatpush1.msra.mxu0 0.0
  %1349 = vmatprep.subr.mxu0 0.0
  %1350 = vmatpush1.msra.mxu0 0.0
  %1351 = vmatprep.subr.mxu0 0.0
  %1352 = vmatpush1.msra.mxu0 0.0
  %1353 = vmatprep.subr.mxu0 0.0
  %1354 = vmatpush1.msra.mxu0 0.0
  %1355 = vmatprep.subr.mxu0 0.0
  %1356 = vmatpush1.msra.mxu0 0.0
  %1357 = vmatprep.subr.mxu0 0.0
  %1358 = vmatpush1.msra.mxu0 0.0
  %1359 = vmatprep.subr.mxu0 0.0
  %1360 = vmatpush1.msra.mxu0 0.0
  %1361 = vmatprep.subr.mxu0 0.0
  %1362 = vmatpush1.msra.mxu0 0.0
  %1363 = vmatprep.subr.mxu0 0.0
  %1364 = vmatpush1.msra.mxu0 0.0
  %1365 = vmatprep.subr.mxu0 0.0
  %1366 = vmatpush1.msra.mxu0 0.0
  %1367 = vmatprep.subr.mxu0 0.0
  %1368 = vmatpush1.msra.mxu0 0.0
  %1369 = vmatprep.subr.mxu0 0.0
  %1370 = vmatpush1.msra.mxu0 0.0
  %1371 = vmatprep.subr.mxu0 0.0
  %1372 = vmatpush1.msra.mxu0 0.0
  %1373 = vmatprep.subr.mxu0 0.0
  %1374 = vmatpush1.msra.mxu0 0.0
  %1375 = vmatprep.mubr.f32.mxu0 0.0
  %1376 = vmatmul.mubr.f32.gmra.mrb[0].mxu0 %v1288
  %v1377 = vpop.f32.mrb[0].mxu0
  %v1378 = vadd.f32 0.0, %v1377
  %v1379 = vpop.f32.mrb[0].mxu0
  %1380 = vmatprep.mubr.f32.mxu0 0.0
  %1381 = vmatmul.mubr.f32.gmra.mrb[0].mxu0 %v1291
  %v1382 = vpop.f32.mrb[0].mxu0
  %v1383 = vadd.f32 0.0, %v1382
  %v1384 = vpop.f32.mrb[0].mxu0
  %1385 = vmatprep.mubr.f32.mxu0 0.0
  %1386 = vmatmul.mubr.f32.gmra.mrb[0].mxu0 %v1294
  %v1387 = vpop.f32.mrb[0].mxu0
  %v1388 = vadd.f32 0.0, %v1387
  %v1389 = vpop.f32.mrb[0].mxu0
  %1390 = vmatprep.mubr.f32.mxu0 0.0
  %1391 = vmatmul.mubr.f32.gmra.mrb[0].mxu0 %v1297
  %v1392 = vpop.f32.mrb[0].mxu0
  %v1393 = vadd.f32 0.0, %v1392
  %v1394 = vpop.f32.mrb[0].mxu0
  %1395 = vmatprep.mubr.f32.mxu0 0.0
  %1396 = vmatmul.mubr.f32.gmra.mrb[0].mxu0 %v1300
  %v1397 = vpop.f32.mrb[0].mxu0
  %v1398 = vadd.f32 0.0, %v1397
  %v1399 = vpop.f32.mrb[0].mxu0
  %1400 = vmatprep.mubr.f32.mxu0 0.0
  %1401 = vmatmul.mubr.f32.gmra.mrb[0].mxu0 %v1303
  %v1402 = vpop.f32.mrb[0].mxu0
  %v1403 = vadd.f32 0.0, %v1402
  %v1404 = vpop.f32.mrb[0].mxu0
  %1405 = vmatprep.mubr.f32.mxu0 0.0
  %1406 = vmatmul.mubr.f32.gmra.mrb[0].mxu0 %v1306
  %v1407 = vpop.f32.mrb[0].mxu0
  %v1408 = vadd.f32 0.0, %v1407
  %v1409 = vpop.f32.mrb[0].mxu0
  %1410 = vmatprep.mubr.f32.mxu0 0.0
  %1411 = vmatmul.mubr.f32.gmra.mrb[0].mxu0 %v1309
  %v1412 = vpop.f32.mrb[0].mxu0
  %v1413 = vadd.f32 0.0, %v1412
  %v1414 = vpop.f32.mrb[0].mxu0
  %1415 = vdwg.mxu0
  %v1416 = vld [vmem:[%s8] sm:$0x3]
  %v1418 = vsel %vm276, %v1416, 0
  %1420 = vmatprep.subr.mxu0 0.0
  %1421 = vmatpush1.xpose.msra.mxu0 %v1288
  %1422 = vmatprep.subr.mxu0 0.0
  %1423 = vmatpush1.xpose.msra.mxu0 %v1291
  %1424 = vmatprep.subr.mxu0 0.0
  %1425 = vmatpush1.xpose.msra.mxu0 %v1294
  %1426 = vmatprep.subr.mxu0 0.0
  %1427 = vmatpush1.xpose.msra.mxu0 %v1297
  %1428 = vmatprep.subr.mxu0 0.0
  %1429 = vmatpush1.xpose.msra.mxu0 %v1300
  %1430 = vmatprep.subr.mxu0 0.0
  %1431 = vmatpush1.xpose.msra.mxu0 %v1303
  %1432 = vmatprep.subr.mxu0 0.0
  %1433 = vmatpush1.xpose.msra.mxu0 %v1306
  %1434 = vmatprep.subr.mxu0 0.0
  %1435 = vmatpush1.xpose.msra.mxu0 %v1309
  %1436 = vmatprep.subr.mxu0 0.0
  %1437 = vmatpush1.xpose.msra.mxu0 0.0
  %1438 = vmatprep.subr.mxu0 0.0
  %1439 = vmatpush1.xpose.msra.mxu0 0.0
  %1440 = vmatprep.subr.mxu0 0.0
  %1441 = vmatpush1.xpose.msra.mxu0 0.0
  %1442 = vmatprep.subr.mxu0 0.0
  %1443 = vmatpush1.xpose.msra.mxu0 0.0
  %1444 = vmatprep.subr.mxu0 0.0
  %1445 = vmatpush1.xpose.msra.mxu0 0.0
  %1446 = vmatprep.subr.mxu0 0.0
  %1447 = vmatpush1.xpose.msra.mxu0 0.0
  %1448 = vmatprep.subr.mxu0 0.0
  %1449 = vmatpush1.xpose.msra.mxu0 0.0
  %1450 = vmatprep.subr.mxu0 0.0
  %1451 = vmatpush1.xpose.msra.mxu0 0.0
  %1452 = vmatprep.subr.mxu0 0.0
  %1453 = vmatpush1.xpose.msra.mxu0 0.0
  %1454 = vmatprep.subr.mxu0 0.0
  %1455 = vmatpush1.xpose.msra.mxu0 0.0
  %1456 = vmatprep.subr.mxu0 0.0
  %1457 = vmatpush1.xpose.msra.mxu0 0.0
  %1458 = vmatprep.subr.mxu0 0.0
  %1459 = vmatpush1.xpose.msra.mxu0 0.0
  %1460 = vmatprep.subr.mxu0 0.0
  %1461 = vmatpush1.xpose.msra.mxu0 0.0
  %1462 = vmatprep.subr.mxu0 0.0
  %1463 = vmatpush1.xpose.msra.mxu0 0.0
  %1464 = vmatprep.subr.mxu0 0.0
  %1465 = vmatpush1.xpose.msra.mxu0 0.0
  %1466 = vmatprep.subr.mxu0 0.0
  %1467 = vmatpush1.xpose.msra.mxu0 0.0
  %1468 = vmatprep.subr.mxu0 0.0
  %1469 = vmatpush1.xpose.msra.mxu0 0.0
  %1470 = vmatprep.subr.mxu0 0.0
  %1471 = vmatpush1.xpose.msra.mxu0 0.0
  %1472 = vmatprep.subr.mxu0 0.0
  %1473 = vmatpush1.xpose.msra.mxu0 0.0
  %1474 = vmatprep.subr.mxu0 0.0
  %1475 = vmatpush1.xpose.msra.mxu0 0.0
  %1476 = vmatprep.subr.mxu0 0.0
  %1477 = vmatpush1.xpose.msra.mxu0 0.0
  %1478 = vmatprep.subr.mxu0 0.0
  %1479 = vmatpush1.xpose.msra.mxu0 0.0
  %1480 = vmatprep.subr.mxu0 0.0
  %1481 = vmatpush1.xpose.msra.mxu0 0.0
  %1482 = vmatprep.subr.mxu0 0.0
  %1483 = vmatpush1.xpose.msra.mxu0 0.0
  %1484 = vmatprep.mubr.f32.mxu0 0.0
  %1485 = vmatmul.mubr.f32.gmra.mrb[0].mxu0 %v1418
  %v1486 = vpop.f32.mrb[0].mxu0
  %v1487 = vadd.f32 0.0, %v1486
  %v1488 = vpop.f32.mrb[0].mxu0
  %1489 = vdwg.mxu0
  %v1490 = vld [vmem:[%s10] sm:$0x1]
  %v1491 = vpack.c.bf16 %v1256, %v1253
  %v1492 = vpack.c.bf16 %v1264, %v1261
  %v1493 = vpack.c.bf16 %v1272, %v1269
  %v1494 = vpack.c.bf16 %v1280, %v1277
  %1496 = vset.pattern.permute.xlu0 0
  %1497 = vperm.xlu0 %1496, %v1378
  %v1498 = vpop.permute.xlu0 %1497
  %1501 = vset.pattern.permute.xlu0 0
  %1502 = vperm.xlu0 %1501, %v1383
  %v1503 = vpop.permute.xlu0 %1502
  %1506 = vset.pattern.permute.xlu0 0
  %1507 = vperm.xlu0 %1506, %v1388
  %v1508 = vpop.permute.xlu0 %1507
  %1511 = vset.pattern.permute.xlu0 0
  %1512 = vperm.xlu0 %1511, %v1393
  %v1513 = vpop.permute.xlu0 %1512
  %1516 = vset.pattern.permute.xlu0 0
  %1517 = vperm.xlu0 %1516, %v1398
  %v1518 = vpop.permute.xlu0 %1517
  %1521 = vset.pattern.permute.xlu0 0
  %1522 = vperm.xlu0 %1521, %v1403
  %v1523 = vpop.permute.xlu0 %1522
  %1526 = vset.pattern.permute.xlu0 0
  %1527 = vperm.xlu0 %1526, %v1408
  %v1528 = vpop.permute.xlu0 %1527
  %1531 = vset.pattern.permute.xlu0 0
  %1532 = vperm.xlu0 %1531, %v1413
  %v1533 = vpop.permute.xlu0 %1532
  %v1535 = vlaneseq
  %v1536 = vshrl.u32 %v1535, 7
  %v1537 = vsub.s32 0, %v1536
  %v1538 = vrot.slane %v1487, %v1537
  %v1539 = vadd.f32 %v1498, %v1538
  %v1540 = vadd.f32 %v1503, %v1538
  %v1541 = vadd.f32 %v1508, %v1538
  %v1542 = vadd.f32 %v1513, %v1538
  %v1543 = vadd.f32 %v1518, %v1538
  %v1544 = vadd.f32 %v1523, %v1538
  %v1545 = vadd.f32 %v1528, %v1538
  %v1546 = vadd.f32 %v1533, %v1538
  %vm1547 = vcmp.gt.f32.partialorder %v1539, 0.0
  %vm1548 = vcmp.gt.f32.partialorder %v1540, 0.0
  %vm1549 = vcmp.gt.f32.partialorder %v1541, 0.0
  %vm1550 = vcmp.gt.f32.partialorder %v1542, 0.0
  %vm1551 = vcmp.gt.f32.partialorder %v1543, 0.0
  %vm1552 = vcmp.gt.f32.partialorder %v1544, 0.0
  %vm1553 = vcmp.gt.f32.partialorder %v1545, 0.0
  %vm1554 = vcmp.gt.f32.partialorder %v1546, 0.0
  %v1555 = vmul.f32 %v1539, 0.2
  %v1556 = vmul.f32 %v1540, 0.2
  %v1557 = vmul.f32 %v1541, 0.2
  %v1558 = vmul.f32 %v1542, 0.2
  %v1559 = vmul.f32 %v1543, 0.2
  %v1560 = vmul.f32 %v1544, 0.2
  %v1561 = vmul.f32 %v1545, 0.2
  %v1562 = vmul.f32 %v1546, 0.2
  %v1563 = vsel %vm1547, %v1539, %v1555
  %v1564 = vsel %vm1548, %v1540, %v1556
  %v1565 = vsel %vm1549, %v1541, %v1557
  %v1566 = vsel %vm1550, %v1542, %v1558
  %v1567 = vsel %vm1551, %v1543, %v1559
  %v1568 = vsel %vm1552, %v1544, %v1560
  %v1569 = vsel %vm1553, %v1545, %v1561
  %v1570 = vsel %vm1554, %v1546, %v1562
  %v1571 = vsel %vm577, %v1563, -1e+09
  %v1572 = vsel %vm578, %v1564, -1e+09
  %v1573 = vsel %vm579, %v1565, -1e+09
  %v1574 = vsel %vm580, %v1566, -1e+09
  %v1575 = vsel %vm581, %v1567, -1e+09
  %v1576 = vsel %vm582, %v1568, -1e+09
  %v1577 = vsel %vm583, %v1569, -1e+09
  %v1578 = vsel %vm584, %v1570, -1e+09
  %v1579 = vsel %vm593, %v1571, -inf
  %1580 = vmax.xlane.f32.xlu0 %v1579
  %v1581 = vpop.xlane.xlu0 %1580
  %v1582 = vsel %vm593, %v1572, -inf
  %1583 = vmax.xlane.f32.xlu0 %v1582
  %v1584 = vpop.xlane.xlu0 %1583
  %v1585 = vsel %vm593, %v1573, -inf
  %1586 = vmax.xlane.f32.xlu0 %v1585
  %v1587 = vpop.xlane.xlu0 %1586
  %v1588 = vsel %vm593, %v1574, -inf
  %1589 = vmax.xlane.f32.xlu0 %v1588
  %v1590 = vpop.xlane.xlu0 %1589
  %v1591 = vsel %vm593, %v1575, -inf
  %1592 = vmax.xlane.f32.xlu0 %v1591
  %v1593 = vpop.xlane.xlu0 %1592
  %v1594 = vsel %vm593, %v1576, -inf
  %1595 = vmax.xlane.f32.xlu0 %v1594
  %v1596 = vpop.xlane.xlu0 %1595
  %v1597 = vsel %vm593, %v1577, -inf
  %1598 = vmax.xlane.f32.xlu0 %v1597
  %v1599 = vpop.xlane.xlu0 %1598
  %v1600 = vsel %vm593, %v1578, -inf
  %1601 = vmax.xlane.f32.xlu0 %v1600
  %v1602 = vpop.xlane.xlu0 %1601
  %v1603 = vsub.f32 %v1571, %v1581
  %v1604 = vsub.f32 %v1572, %v1584
  %v1605 = vsub.f32 %v1573, %v1587
  %v1606 = vsub.f32 %v1574, %v1590
  %v1607 = vsub.f32 %v1575, %v1593
  %v1608 = vsub.f32 %v1576, %v1596
  %v1609 = vsub.f32 %v1577, %v1599
  %v1610 = vsub.f32 %v1578, %v1602
  %v1611 = vmul.f32 %v1603, 1.442695
  %v1612 = vpow.pop %v1611
  %v1613 = vmul.f32 %v1604, 1.442695
  %v1614 = vpow.pop %v1613
  %v1615 = vmul.f32 %v1605, 1.442695
  %v1616 = vpow.pop %v1615
  %v1617 = vmul.f32 %v1606, 1.442695
  %v1618 = vpow.pop %v1617
  %v1619 = vmul.f32 %v1607, 1.442695
  %v1620 = vpow.pop %v1619
  %v1621 = vmul.f32 %v1608, 1.442695
  %v1622 = vpow.pop %v1621
  %v1623 = vmul.f32 %v1609, 1.442695
  %v1624 = vpow.pop %v1623
  %v1625 = vmul.f32 %v1610, 1.442695
  %v1626 = vpow.pop %v1625
  %v1627 = vsel %vm593, %v1612, 0.0
  %1628 = vadd.xlane.f32.xlu0 %v1627
  %v1629 = vpop.xlane.xlu0 %1628
  %v1630 = vsel %vm593, %v1614, 0.0
  %1631 = vadd.xlane.f32.xlu0 %v1630
  %v1632 = vpop.xlane.xlu0 %1631
  %v1633 = vsel %vm593, %v1616, 0.0
  %1634 = vadd.xlane.f32.xlu0 %v1633
  %v1635 = vpop.xlane.xlu0 %1634
  %v1636 = vsel %vm593, %v1618, 0.0
  %1637 = vadd.xlane.f32.xlu0 %v1636
  %v1638 = vpop.xlane.xlu0 %1637
  %v1639 = vsel %vm593, %v1620, 0.0
  %1640 = vadd.xlane.f32.xlu0 %v1639
  %v1641 = vpop.xlane.xlu0 %1640
  %v1642 = vsel %vm593, %v1622, 0.0
  %1643 = vadd.xlane.f32.xlu0 %v1642
  %v1644 = vpop.xlane.xlu0 %1643
  %v1645 = vsel %vm593, %v1624, 0.0
  %1646 = vadd.xlane.f32.xlu0 %v1645
  %v1647 = vpop.xlane.xlu0 %1646
  %v1648 = vsel %vm593, %v1626, 0.0
  %1649 = vadd.xlane.f32.xlu0 %v1648
  %v1650 = vpop.xlane.xlu0 %1649
  %v1651 = vpack.c.bf16 %v1614, %v1612
  %v1652 = vpack.c.bf16 %v1618, %v1616
  %v1653 = vpack.c.bf16 %v1622, %v1620
  %v1654 = vpack.c.bf16 %v1626, %v1624
  %v1656 = vsel %vm593, %v1651, 0
  %v1659 = vsel %vm593, %v1652, 0
  %v1662 = vsel %vm593, %v1653, 0
  %v1665 = vsel %vm593, %v1654, 0
  %1667 = vmatprep.subr.bf16.mxu0 0
  %1668 = vmatpush1.bf16.msra.mxu0 %v1491
  %1669 = vmatprep.subr.bf16.mxu0 0
  %1670 = vmatpush1.bf16.msra.mxu0 %v1492
  %1671 = vmatprep.subr.bf16.mxu0 0
  %1672 = vmatpush1.bf16.msra.mxu0 %v1493
  %1673 = vmatprep.subr.bf16.mxu0 0
  %1674 = vmatpush1.bf16.msra.mxu0 %v1494
  %1675 = vmatprep.subr.bf16.mxu0 0
  %1676 = vmatpush1.bf16.msra.mxu0 0
  %1677 = vmatprep.subr.bf16.mxu0 0
  %1678 = vmatpush1.bf16.msra.mxu0 0
  %1679 = vmatprep.subr.bf16.mxu0 0
  %1680 = vmatpush1.bf16.msra.mxu0 0
  %1681 = vmatprep.subr.bf16.mxu0 0
  %1682 = vmatpush1.bf16.msra.mxu0 0
  %1683 = vmatprep.subr.bf16.mxu0 0
  %1684 = vmatpush1.bf16.msra.mxu0 0
  %1685 = vmatprep.subr.bf16.mxu0 0
  %1686 = vmatpush1.bf16.msra.mxu0 0
  %1687 = vmatprep.subr.bf16.mxu0 0
  %1688 = vmatpush1.bf16.msra.mxu0 0
  %1689 = vmatprep.subr.bf16.mxu0 0
  %1690 = vmatpush1.bf16.msra.mxu0 0
  %1691 = vmatprep.subr.bf16.mxu0 0
  %1692 = vmatpush1.bf16.msra.mxu0 0
  %1693 = vmatprep.subr.bf16.mxu0 0
  %1694 = vmatpush1.bf16.msra.mxu0 0
  %1695 = vmatprep.subr.bf16.mxu0 0
  %1696 = vmatpush1.bf16.msra.mxu0 0
  %1697 = vmatprep.subr.bf16.mxu0 0
  %1698 = vmatpush1.bf16.msra.mxu0 0
  %1699 = vmatprep.mubr.bf16.mxu0 0
  %1700 = vmatmul.mubr.bf16.gmra.mrb[0].mxu0 %v1656
  %v1701 = vpop.f32.mrb[0].mxu0
  %v1702 = vadd.f32 0.0, %v1701
  %v1703 = vpop.f32.mrb[0].mxu0
  %v1704 = vpop.f32.mrb[0].mxu0
  %v1705 = vadd.f32 0.0, %v1704
  %v1706 = vpop.f32.mrb[0].mxu0
  %1707 = vmatprep.mubr.bf16.mxu0 0
  %1708 = vmatmul.mubr.bf16.gmra.mrb[0].mxu0 %v1659
  %v1709 = vpop.f32.mrb[0].mxu0
  %v1710 = vadd.f32 0.0, %v1709
  %v1711 = vpop.f32.mrb[0].mxu0
  %v1712 = vpop.f32.mrb[0].mxu0
  %v1713 = vadd.f32 0.0, %v1712
  %v1714 = vpop.f32.mrb[0].mxu0
  %1715 = vmatprep.mubr.bf16.mxu0 0
  %1716 = vmatmul.mubr.bf16.gmra.mrb[0].mxu0 %v1662
  %v1717 = vpop.f32.mrb[0].mxu0
  %v1718 = vadd.f32 0.0, %v1717
  %v1719 = vpop.f32.mrb[0].mxu0
  %v1720 = vpop.f32.mrb[0].mxu0
  %v1721 = vadd.f32 0.0, %v1720
  %v1722 = vpop.f32.mrb[0].mxu0
  %1723 = vmatprep.mubr.bf16.mxu0 0
  %1724 = vmatmul.mubr.bf16.gmra.mrb[0].mxu0 %v1665
  %v1725 = vpop.f32.mrb[0].mxu0
  %v1726 = vadd.f32 0.0, %v1725
  %v1727 = vpop.f32.mrb[0].mxu0
  %v1728 = vpop.f32.mrb[0].mxu0
  %v1729 = vadd.f32 0.0, %v1728
  %v1730 = vpop.f32.mrb[0].mxu0
  %1731 = vdwg.mxu0
  %v1732 = vrcp.pop %v1629
  %v1733 = vrcp.pop %v1632
  %v1734 = vrcp.pop %v1635
  %v1735 = vrcp.pop %v1638
  %v1736 = vrcp.pop %v1641
  %v1737 = vrcp.pop %v1644
  %v1738 = vrcp.pop %v1647
  %v1739 = vrcp.pop %v1650
  %v1740 = vmul.f32 %v1702, %v1732
  %v1741 = vmul.f32 %v1705, %v1733
  %v1742 = vmul.f32 %v1710, %v1734
  %v1743 = vmul.f32 %v1713, %v1735
  %v1744 = vmul.f32 %v1718, %v1736
  %v1745 = vmul.f32 %v1721, %v1737
  %v1746 = vmul.f32 %v1726, %v1738
  %v1747 = vmul.f32 %v1729, %v1739
  %v1748 = vadd.f32 %v1740, %v1178
  %v1749 = vadd.f32 %v1741, %v1179
  %v1750 = vadd.f32 %v1742, %v1180
  %v1751 = vadd.f32 %v1743, %v1181
  %v1752 = vadd.f32 %v1744, %v1182
  %v1753 = vadd.f32 %v1745, %v1183
  %v1754 = vadd.f32 %v1746, %v1184
  %v1755 = vadd.f32 %v1747, %v1185
  %v1757 = vlaneseq
  %v1758 = vshrl.u32 %v1757, 7
  %v1759 = vsub.s32 0, %v1758
  %v1760 = vrot.slane %v1490, %v1759
  %v1762 = vadd.f32 %v1748, %v1760
  %v1763 = vadd.f32 %v1749, %v1760
  %v1764 = vadd.f32 %v1750, %v1760
  %v1765 = vadd.f32 %v1751, %v1760
  %v1766 = vadd.f32 %v1752, %v1760
  %v1767 = vadd.f32 %v1753, %v1760
  %v1768 = vadd.f32 %v1754, %v1760
  %v1769 = vadd.f32 %v1755, %v1760
  %1770 = vset.pattern.permute.xlu0 1
  %1771 = vperm.xlu0 %1770, %v1378
  %v1772 = vpop.permute.xlu0 %1771
  %1774 = vset.pattern.permute.xlu0 1
  %1775 = vperm.xlu0 %1774, %v1383
  %v1776 = vpop.permute.xlu0 %1775
  %1778 = vset.pattern.permute.xlu0 1
  %1779 = vperm.xlu0 %1778, %v1388
  %v1780 = vpop.permute.xlu0 %1779
  %1782 = vset.pattern.permute.xlu0 1
  %1783 = vperm.xlu0 %1782, %v1393
  %v1784 = vpop.permute.xlu0 %1783
  %1786 = vset.pattern.permute.xlu0 1
  %1787 = vperm.xlu0 %1786, %v1398
  %v1788 = vpop.permute.xlu0 %1787
  %1790 = vset.pattern.permute.xlu0 1
  %1791 = vperm.xlu0 %1790, %v1403
  %v1792 = vpop.permute.xlu0 %1791
  %1794 = vset.pattern.permute.xlu0 1
  %1795 = vperm.xlu0 %1794, %v1408
  %v1796 = vpop.permute.xlu0 %1795
  %1798 = vset.pattern.permute.xlu0 1
  %1799 = vperm.xlu0 %1798, %v1413
  %v1800 = vpop.permute.xlu0 %1799
  %v1802 = vlaneseq
  %v1803 = vshrl.u32 %v1802, 7
  %v1804 = vsub.s32 1, %v1803
  %v1805 = vrot.slane %v1487, %v1804
  %v1806 = vadd.f32 %v1772, %v1805
  %v1807 = vadd.f32 %v1776, %v1805
  %v1808 = vadd.f32 %v1780, %v1805
  %v1809 = vadd.f32 %v1784, %v1805
  %v1810 = vadd.f32 %v1788, %v1805
  %v1811 = vadd.f32 %v1792, %v1805
  %v1812 = vadd.f32 %v1796, %v1805
  %v1813 = vadd.f32 %v1800, %v1805
  %vm1814 = vcmp.gt.f32.partialorder %v1806, 0.0
  %vm1815 = vcmp.gt.f32.partialorder %v1807, 0.0
  %vm1816 = vcmp.gt.f32.partialorder %v1808, 0.0
  %vm1817 = vcmp.gt.f32.partialorder %v1809, 0.0
  %vm1818 = vcmp.gt.f32.partialorder %v1810, 0.0
  %vm1819 = vcmp.gt.f32.partialorder %v1811, 0.0
  %vm1820 = vcmp.gt.f32.partialorder %v1812, 0.0
  %vm1821 = vcmp.gt.f32.partialorder %v1813, 0.0
  %v1822 = vmul.f32 %v1806, 0.2
  %v1823 = vmul.f32 %v1807, 0.2
  %v1824 = vmul.f32 %v1808, 0.2
  %v1825 = vmul.f32 %v1809, 0.2
  %v1826 = vmul.f32 %v1810, 0.2
  %v1827 = vmul.f32 %v1811, 0.2
  %v1828 = vmul.f32 %v1812, 0.2
  %v1829 = vmul.f32 %v1813, 0.2
  %v1830 = vsel %vm1814, %v1806, %v1822
  %v1831 = vsel %vm1815, %v1807, %v1823
  %v1832 = vsel %vm1816, %v1808, %v1824
  %v1833 = vsel %vm1817, %v1809, %v1825
  %v1834 = vsel %vm1818, %v1810, %v1826
  %v1835 = vsel %vm1819, %v1811, %v1827
  %v1836 = vsel %vm1820, %v1812, %v1828
  %v1837 = vsel %vm1821, %v1813, %v1829
  %v1838 = vsel %vm577, %v1830, -1e+09
  %v1839 = vsel %vm578, %v1831, -1e+09
  %v1840 = vsel %vm579, %v1832, -1e+09
  %v1841 = vsel %vm580, %v1833, -1e+09
  %v1842 = vsel %vm581, %v1834, -1e+09
  %v1843 = vsel %vm582, %v1835, -1e+09
  %v1844 = vsel %vm583, %v1836, -1e+09
  %v1845 = vsel %vm584, %v1837, -1e+09
  %v1846 = vsel %vm593, %v1838, -inf
  %1847 = vmax.xlane.f32.xlu0 %v1846
  %v1848 = vpop.xlane.xlu0 %1847
  %v1849 = vsel %vm593, %v1839, -inf
  %1850 = vmax.xlane.f32.xlu0 %v1849
  %v1851 = vpop.xlane.xlu0 %1850
  %v1852 = vsel %vm593, %v1840, -inf
  %1853 = vmax.xlane.f32.xlu0 %v1852
  %v1854 = vpop.xlane.xlu0 %1853
  %v1855 = vsel %vm593, %v1841, -inf
  %1856 = vmax.xlane.f32.xlu0 %v1855
  %v1857 = vpop.xlane.xlu0 %1856
  %v1858 = vsel %vm593, %v1842, -inf
  %1859 = vmax.xlane.f32.xlu0 %v1858
  %v1860 = vpop.xlane.xlu0 %1859
  %v1861 = vsel %vm593, %v1843, -inf
  %1862 = vmax.xlane.f32.xlu0 %v1861
  %v1863 = vpop.xlane.xlu0 %1862
  %v1864 = vsel %vm593, %v1844, -inf
  %1865 = vmax.xlane.f32.xlu0 %v1864
  %v1866 = vpop.xlane.xlu0 %1865
  %v1867 = vsel %vm593, %v1845, -inf
  %1868 = vmax.xlane.f32.xlu0 %v1867
  %v1869 = vpop.xlane.xlu0 %1868
  %v1870 = vsub.f32 %v1838, %v1848
  %v1871 = vsub.f32 %v1839, %v1851
  %v1872 = vsub.f32 %v1840, %v1854
  %v1873 = vsub.f32 %v1841, %v1857
  %v1874 = vsub.f32 %v1842, %v1860
  %v1875 = vsub.f32 %v1843, %v1863
  %v1876 = vsub.f32 %v1844, %v1866
  %v1877 = vsub.f32 %v1845, %v1869
  %v1878 = vmul.f32 %v1870, 1.442695
  %v1879 = vpow.pop %v1878
  %v1880 = vmul.f32 %v1871, 1.442695
  %v1881 = vpow.pop %v1880
  %v1882 = vmul.f32 %v1872, 1.442695
  %v1883 = vpow.pop %v1882
  %v1884 = vmul.f32 %v1873, 1.442695
  %v1885 = vpow.pop %v1884
  %v1886 = vmul.f32 %v1874, 1.442695
  %v1887 = vpow.pop %v1886
  %v1888 = vmul.f32 %v1875, 1.442695
  %v1889 = vpow.pop %v1888
  %v1890 = vmul.f32 %v1876, 1.442695
  %v1891 = vpow.pop %v1890
  %v1892 = vmul.f32 %v1877, 1.442695
  %v1893 = vpow.pop %v1892
  %v1894 = vsel %vm593, %v1879, 0.0
  %1895 = vadd.xlane.f32.xlu0 %v1894
  %v1896 = vpop.xlane.xlu0 %1895
  %v1897 = vsel %vm593, %v1881, 0.0
  %1898 = vadd.xlane.f32.xlu0 %v1897
  %v1899 = vpop.xlane.xlu0 %1898
  %v1900 = vsel %vm593, %v1883, 0.0
  %1901 = vadd.xlane.f32.xlu0 %v1900
  %v1902 = vpop.xlane.xlu0 %1901
  %v1903 = vsel %vm593, %v1885, 0.0
  %1904 = vadd.xlane.f32.xlu0 %v1903
  %v1905 = vpop.xlane.xlu0 %1904
  %v1906 = vsel %vm593, %v1887, 0.0
  %1907 = vadd.xlane.f32.xlu0 %v1906
  %v1908 = vpop.xlane.xlu0 %1907
  %v1909 = vsel %vm593, %v1889, 0.0
  %1910 = vadd.xlane.f32.xlu0 %v1909
  %v1911 = vpop.xlane.xlu0 %1910
  %v1912 = vsel %vm593, %v1891, 0.0
  %1913 = vadd.xlane.f32.xlu0 %v1912
  %v1914 = vpop.xlane.xlu0 %1913
  %v1915 = vsel %vm593, %v1893, 0.0
  %1916 = vadd.xlane.f32.xlu0 %v1915
  %v1917 = vpop.xlane.xlu0 %1916
  %v1918 = vpack.c.bf16 %v1881, %v1879
  %v1919 = vpack.c.bf16 %v1885, %v1883
  %v1920 = vpack.c.bf16 %v1889, %v1887
  %v1921 = vpack.c.bf16 %v1893, %v1891
  %1926 = vrot.lane.b32.xlu0 %v1491, 112
  %v1927 = vpop.permute.xlu0 %1926
  %1928 = vrot.lane.b32.xlu0 %v1492, 112
  %v1929 = vpop.permute.xlu0 %1928
  %1930 = vrot.lane.b32.xlu0 %v1493, 112
  %v1931 = vpop.permute.xlu0 %1930
  %1932 = vrot.lane.b32.xlu0 %v1494, 112
  %v1933 = vpop.permute.xlu0 %1932
  %v1939 = vsel %vm593, %v1918, 0
  %v1942 = vsel %vm593, %v1919, 0
  %v1945 = vsel %vm593, %v1920, 0
  %v1948 = vsel %vm593, %v1921, 0
  %1950 = vmatprep.subr.bf16.mxu0 0
  %1951 = vmatpush1.bf16.msra.mxu0 %v1927
  %1952 = vmatprep.subr.bf16.mxu0 0
  %1953 = vmatpush1.bf16.msra.mxu0 %v1929
  %1954 = vmatprep.subr.bf16.mxu0 0
  %1955 = vmatpush1.bf16.msra.mxu0 %v1931
  %1956 = vmatprep.subr.bf16.mxu0 0
  %1957 = vmatpush1.bf16.msra.mxu0 %v1933
  %1958 = vmatprep.subr.bf16.mxu0 0
  %1959 = vmatpush1.bf16.msra.mxu0 0
  %1960 = vmatprep.subr.bf16.mxu0 0
  %1961 = vmatpush1.bf16.msra.mxu0 0
  %1962 = vmatprep.subr.bf16.mxu0 0
  %1963 = vmatpush1.bf16.msra.mxu0 0
  %1964 = vmatprep.subr.bf16.mxu0 0
  %1965 = vmatpush1.bf16.msra.mxu0 0
  %1966 = vmatprep.subr.bf16.mxu0 0
  %1967 = vmatpush1.bf16.msra.mxu0 0
  %1968 = vmatprep.subr.bf16.mxu0 0
  %1969 = vmatpush1.bf16.msra.mxu0 0
  %1970 = vmatprep.subr.bf16.mxu0 0
  %1971 = vmatpush1.bf16.msra.mxu0 0
  %1972 = vmatprep.subr.bf16.mxu0 0
  %1973 = vmatpush1.bf16.msra.mxu0 0
  %1974 = vmatprep.subr.bf16.mxu0 0
  %1975 = vmatpush1.bf16.msra.mxu0 0
  %1976 = vmatprep.subr.bf16.mxu0 0
  %1977 = vmatpush1.bf16.msra.mxu0 0
  %1978 = vmatprep.subr.bf16.mxu0 0
  %1979 = vmatpush1.bf16.msra.mxu0 0
  %1980 = vmatprep.subr.bf16.mxu0 0
  %1981 = vmatpush1.bf16.msra.mxu0 0
  %1982 = vmatprep.mubr.bf16.mxu0 0
  %1983 = vmatmul.mubr.bf16.gmra.mrb[0].mxu0 %v1939
  %v1984 = vpop.f32.mrb[0].mxu0
  %v1985 = vadd.f32 0.0, %v1984
  %v1986 = vpop.f32.mrb[0].mxu0
  %v1987 = vpop.f32.mrb[0].mxu0
  %v1988 = vadd.f32 0.0, %v1987
  %v1989 = vpop.f32.mrb[0].mxu0
  %1990 = vmatprep.mubr.bf16.mxu0 0
  %1991 = vmatmul.mubr.bf16.gmra.mrb[0].mxu0 %v1942
  %v1992 = vpop.f32.mrb[0].mxu0
  %v1993 = vadd.f32 0.0, %v1992
  %v1994 = vpop.f32.mrb[0].mxu0
  %v1995 = vpop.f32.mrb[0].mxu0
  %v1996 = vadd.f32 0.0, %v1995
  %v1997 = vpop.f32.mrb[0].mxu0
  %1998 = vmatprep.mubr.bf16.mxu0 0
  %1999 = vmatmul.mubr.bf16.gmra.mrb[0].mxu0 %v1945
  %v2000 = vpop.f32.mrb[0].mxu0
  %v2001 = vadd.f32 0.0, %v2000
  %v2002 = vpop.f32.mrb[0].mxu0
  %v2003 = vpop.f32.mrb[0].mxu0
  %v2004 = vadd.f32 0.0, %v2003
  %v2005 = vpop.f32.mrb[0].mxu0
  %2006 = vmatprep.mubr.bf16.mxu0 0
  %2007 = vmatmul.mubr.bf16.gmra.mrb[0].mxu0 %v1948
  %v2008 = vpop.f32.mrb[0].mxu0
  %v2009 = vadd.f32 0.0, %v2008
  %v2010 = vpop.f32.mrb[0].mxu0
  %v2011 = vpop.f32.mrb[0].mxu0
  %v2012 = vadd.f32 0.0, %v2011
  %v2013 = vpop.f32.mrb[0].mxu0
  %2014 = vdwg.mxu0
  %v2015 = vrcp.pop %v1896
  %v2016 = vrcp.pop %v1899
  %v2017 = vrcp.pop %v1902
  %v2018 = vrcp.pop %v1905
  %v2019 = vrcp.pop %v1908
  %v2020 = vrcp.pop %v1911
  %v2021 = vrcp.pop %v1914
  %v2022 = vrcp.pop %v1917
  %v2023 = vmul.f32 %v1985, %v2015
  %v2024 = vmul.f32 %v1988, %v2016
  %v2025 = vmul.f32 %v1993, %v2017
  %v2026 = vmul.f32 %v1996, %v2018
  %v2027 = vmul.f32 %v2001, %v2019
  %v2028 = vmul.f32 %v2004, %v2020
  %v2029 = vmul.f32 %v2009, %v2021
  %v2030 = vmul.f32 %v2012, %v2022
  %2039 = vrot.lane.b32.xlu0 %v1178, 112
  %v2040 = vpop.permute.xlu0 %2039
  %2041 = vrot.lane.b32.xlu0 %v1179, 112
  %v2042 = vpop.permute.xlu0 %2041
  %2043 = vrot.lane.b32.xlu0 %v1180, 112
  %v2044 = vpop.permute.xlu0 %2043
  %2045 = vrot.lane.b32.xlu0 %v1181, 112
  %v2046 = vpop.permute.xlu0 %2045
  %2047 = vrot.lane.b32.xlu0 %v1182, 112
  %v2048 = vpop.permute.xlu0 %2047
  %2049 = vrot.lane.b32.xlu0 %v1183, 112
  %v2050 = vpop.permute.xlu0 %2049
  %2051 = vrot.lane.b32.xlu0 %v1184, 112
  %v2052 = vpop.permute.xlu0 %2051
  %2053 = vrot.lane.b32.xlu0 %v1185, 112
  %v2054 = vpop.permute.xlu0 %2053
  %v2063 = vadd.f32 %v2023, %v2040
  %v2064 = vadd.f32 %v2024, %v2042
  %v2065 = vadd.f32 %v2025, %v2044
  %v2066 = vadd.f32 %v2026, %v2046
  %v2067 = vadd.f32 %v2027, %v2048
  %v2068 = vadd.f32 %v2028, %v2050
  %v2069 = vadd.f32 %v2029, %v2052
  %v2070 = vadd.f32 %v2030, %v2054
  %2071 = vrot.lane.b32.xlu0 %v1760, 112
  %v2072 = vpop.permute.xlu0 %2071
  %v2074 = vadd.f32 %v2063, %v2072
  %v2075 = vadd.f32 %v2064, %v2072
  %v2076 = vadd.f32 %v2065, %v2072
  %v2077 = vadd.f32 %v2066, %v2072
  %v2078 = vadd.f32 %v2067, %v2072
  %v2079 = vadd.f32 %v2068, %v2072
  %v2080 = vadd.f32 %v2069, %v2072
  %v2081 = vadd.f32 %v2070, %v2072
  %2090 = vrot.lane.b32.xlu0 %v2074, 16
  %v2091 = vpop.permute.xlu0 %2090
  %2092 = vrot.lane.b32.xlu0 %v2075, 16
  %v2093 = vpop.permute.xlu0 %2092
  %2094 = vrot.lane.b32.xlu0 %v2076, 16
  %v2095 = vpop.permute.xlu0 %2094
  %2096 = vrot.lane.b32.xlu0 %v2077, 16
  %v2097 = vpop.permute.xlu0 %2096
  %2098 = vrot.lane.b32.xlu0 %v2078, 16
  %v2099 = vpop.permute.xlu0 %2098
  %2100 = vrot.lane.b32.xlu0 %v2079, 16
  %v2101 = vpop.permute.xlu0 %2100
  %2102 = vrot.lane.b32.xlu0 %v2080, 16
  %v2103 = vpop.permute.xlu0 %2102
  %2104 = vrot.lane.b32.xlu0 %v2081, 16
  %v2105 = vpop.permute.xlu0 %2104
  %v2114 = vsel %vm1129, %v1762, %v2091
  %v2115 = vsel %vm1129, %v1763, %v2093
  %v2116 = vsel %vm1129, %v1764, %v2095
  %v2117 = vsel %vm1129, %v1765, %v2097
  %v2118 = vsel %vm1129, %v1766, %v2099
  %v2119 = vsel %vm1129, %v1767, %v2101
  %v2120 = vsel %vm1129, %v1768, %v2103
  %v2121 = vsel %vm1129, %v1769, %v2105
  %vm2122 = vcmp.gt.f32.partialorder %v2114, 0.0
  %vm2123 = vcmp.gt.f32.partialorder %v2115, 0.0
  %vm2124 = vcmp.gt.f32.partialorder %v2116, 0.0
  %vm2125 = vcmp.gt.f32.partialorder %v2117, 0.0
  %vm2126 = vcmp.gt.f32.partialorder %v2118, 0.0
  %vm2127 = vcmp.gt.f32.partialorder %v2119, 0.0
  %vm2128 = vcmp.gt.f32.partialorder %v2120, 0.0
  %vm2129 = vcmp.gt.f32.partialorder %v2121, 0.0
  %v2130 = vmin.f32 %v2114, 0.0
  %v2131 = vmin.f32 %v2115, 0.0
  %v2132 = vmin.f32 %v2116, 0.0
  %v2133 = vmin.f32 %v2117, 0.0
  %v2134 = vmin.f32 %v2118, 0.0
  %v2135 = vmin.f32 %v2119, 0.0
  %v2136 = vmin.f32 %v2120, 0.0
  %v2137 = vmin.f32 %v2121, 0.0
  %v2138 = vmul.f32 %v2130, 1.442695
  %v2139 = vpow.pop %v2138
  %v2140 = vmul.f32 %v2131, 1.442695
  %v2141 = vpow.pop %v2140
  %v2142 = vmul.f32 %v2132, 1.442695
  %v2143 = vpow.pop %v2142
  %v2144 = vmul.f32 %v2133, 1.442695
  %v2145 = vpow.pop %v2144
  %v2146 = vmul.f32 %v2134, 1.442695
  %v2147 = vpow.pop %v2146
  %v2148 = vmul.f32 %v2135, 1.442695
  %v2149 = vpow.pop %v2148
  %v2150 = vmul.f32 %v2136, 1.442695
  %v2151 = vpow.pop %v2150
  %v2152 = vmul.f32 %v2137, 1.442695
  %v2153 = vpow.pop %v2152
  %v2154 = vsub.f32 %v2139, 1.0
  %v2155 = vsub.f32 %v2141, 1.0
  %v2156 = vsub.f32 %v2143, 1.0
  %v2157 = vsub.f32 %v2145, 1.0
  %v2158 = vsub.f32 %v2147, 1.0
  %v2159 = vsub.f32 %v2149, 1.0
  %v2160 = vsub.f32 %v2151, 1.0
  %v2161 = vsub.f32 %v2153, 1.0
  %v2162 = vsel %vm2122, %v2114, %v2154
  %v2163 = vsel %vm2123, %v2115, %v2155
  %v2164 = vsel %vm2124, %v2116, %v2156
  %v2165 = vsel %vm2125, %v2117, %v2157
  %v2166 = vsel %vm2126, %v2118, %v2158
  %v2167 = vsel %vm2127, %v2119, %v2159
  %v2168 = vsel %vm2128, %v2120, %v2160
  %v2169 = vsel %vm2129, %v2121, %v2161
  %v2170 = vsel %vm276, %v2162, 0.0
  %v2171 = vsel %vm276, %v2163, 0.0
  %v2172 = vadd.f32 %v2170, %v2171
  %v2173 = vsel %vm276, %v2164, 0.0
  %v2174 = vadd.f32 %v2172, %v2173
  %v2175 = vsel %vm276, %v2165, 0.0
  %v2176 = vadd.f32 %v2174, %v2175
  %v2177 = vsel %vm276, %v2166, 0.0
  %v2178 = vadd.f32 %v2176, %v2177
  %v2179 = vsel %vm276, %v2167, 0.0
  %v2180 = vadd.f32 %v2178, %v2179
  %v2181 = vsel %vm276, %v2168, 0.0
  %v2182 = vadd.f32 %v2180, %v2181
  %v2183 = vsel %vm276, %v2169, 0.0
  %v2184 = vadd.f32 %v2182, %v2183
  %v2185 = vrot.slane %v2184, 4
  %v2186 = vadd.f32 %v2184, %v2185
  %v2187 = vrot.slane %v2186, 2
  %v2188 = vadd.f32 %v2186, %v2187
  %v2189 = vrot.slane %v2188, 1
  %v2190 = vadd.f32 %v2188, %v2189
  %v2191 = vmul.f32 %v2190, 0.015625
  %v2192 = vmul.f32 %v2162, %v2162
  %v2193 = vmul.f32 %v2163, %v2163
  %v2194 = vmul.f32 %v2164, %v2164
  %v2195 = vmul.f32 %v2165, %v2165
  %v2196 = vmul.f32 %v2166, %v2166
  %v2197 = vmul.f32 %v2167, %v2167
  %v2198 = vmul.f32 %v2168, %v2168
  %v2199 = vmul.f32 %v2169, %v2169
  %v2200 = vsel %vm276, %v2192, 0.0
  %v2201 = vsel %vm276, %v2193, 0.0
  %v2202 = vadd.f32 %v2200, %v2201
  %v2203 = vsel %vm276, %v2194, 0.0
  %v2204 = vadd.f32 %v2202, %v2203
  %v2205 = vsel %vm276, %v2195, 0.0
  %v2206 = vadd.f32 %v2204, %v2205
  %v2207 = vsel %vm276, %v2196, 0.0
  %v2208 = vadd.f32 %v2206, %v2207
  %v2209 = vsel %vm276, %v2197, 0.0
  %v2210 = vadd.f32 %v2208, %v2209
  %v2211 = vsel %vm276, %v2198, 0.0
  %v2212 = vadd.f32 %v2210, %v2211
  %v2213 = vsel %vm276, %v2199, 0.0
  %v2214 = vadd.f32 %v2212, %v2213
  %v2215 = vrot.slane %v2214, 4
  %v2216 = vadd.f32 %v2214, %v2215
  %v2217 = vrot.slane %v2216, 2
  %v2218 = vadd.f32 %v2216, %v2217
  %v2219 = vrot.slane %v2218, 1
  %v2220 = vadd.f32 %v2218, %v2219
  %v2221 = vmul.f32 %v2220, 0.015625
  %v2222 = vmul.f32 %v2191, %v2191
  %v2223 = vsub.f32 %v2221, %v2222
  %v2224 = vadd.f32 %v2223, 1e-05
  %v2225 = vrsqrt.pop %v2224
  %v2226 = vsub.f32 %v2162, %v2191
  %v2227 = vsub.f32 %v2163, %v2191
  %v2228 = vsub.f32 %v2164, %v2191
  %v2229 = vsub.f32 %v2165, %v2191
  %v2230 = vsub.f32 %v2166, %v2191
  %v2231 = vsub.f32 %v2167, %v2191
  %v2232 = vsub.f32 %v2168, %v2191
  %v2233 = vsub.f32 %v2169, %v2191
  %v2234 = vmul.f32 %v2226, %v2225
  %v2235 = vmul.f32 %v2227, %v2225
  %v2236 = vmul.f32 %v2228, %v2225
  %v2237 = vmul.f32 %v2229, %v2225
  %v2238 = vmul.f32 %v2230, %v2225
  %v2239 = vmul.f32 %v2231, %v2225
  %v2240 = vmul.f32 %v2232, %v2225
  %v2241 = vmul.f32 %v2233, %v2225
  %v2242 = vld [vmem:[%s11] sm:$0x1]
  %v2244 = vlaneseq
  %v2245 = vshrl.u32 %v2244, 7
  %v2246 = vsub.s32 0, %v2245
  %v2247 = vrot.slane %v2242, %v2246
  %v2249 = vmul.f32 %v2234, %v2247
  %v2250 = vmul.f32 %v2235, %v2247
  %v2251 = vmul.f32 %v2236, %v2247
  %v2252 = vmul.f32 %v2237, %v2247
  %v2253 = vmul.f32 %v2238, %v2247
  %v2254 = vmul.f32 %v2239, %v2247
  %v2255 = vmul.f32 %v2240, %v2247
  %v2256 = vmul.f32 %v2241, %v2247
  %v2257 = vld [vmem:[%s12] sm:$0x1]
  %v2259 = vlaneseq
  %v2260 = vshrl.u32 %v2259, 7
  %v2261 = vsub.s32 0, %v2260
  %v2262 = vrot.slane %v2257, %v2261
  %v2264 = vadd.f32 %v2249, %v2262
  %v2265 = vadd.f32 %v2250, %v2262
  %v2266 = vadd.f32 %v2251, %v2262
  %v2267 = vadd.f32 %v2252, %v2262
  %v2268 = vadd.f32 %v2253, %v2262
  %v2269 = vadd.f32 %v2254, %v2262
  %v2270 = vadd.f32 %v2255, %v2262
  %v2271 = vadd.f32 %v2256, %v2262
  %v2272 = vpack.c.bf16 %v2265, %v2264
  %v2273 = vpack.c.bf16 %v2267, %v2266
  %v2274 = vpack.c.bf16 %v2269, %v2268
  %v2275 = vpack.c.bf16 %v2271, %v2270
  %v2276 = vld [vmem:[%s13] sm:$0xf]
  %v2277 = vld [vmem:[%s13 + $0x4] sm:$0xf]
  %v2278 = vld [vmem:[%s13 + $0x8] sm:$0xf]
  %v2279 = vld [vmem:[%s13 + $0xc] sm:$0xf]
  %v2280 = vld [vmem:[%s14] sm:$0x1]
  %v2282 = vlaneseq
  %v2283 = vshrl.u32 %v2282, 7
  %v2284 = vsub.s32 0, %v2283
  %v2285 = vrot.slane %v2280, %v2284
  %v2291 = vunpack.c.l.b16 %v2276
  %v2292 = vunpack.c.l.b16 %v2277
  %v2293 = vunpack.c.l.b16 %v2278
  %v2294 = vunpack.c.l.b16 %v2279
  %v2295 = vpack.c.b16 %v2292, %v2291
  %v2296 = vpack.c.b16 %v2294, %v2293
  %v2300 = vsel %vm276, %v2272, 0
  %v2303 = vsel %vm276, %v2273, 0
  %v2306 = vsel %vm276, %v2274, 0
  %v2309 = vsel %vm276, %v2275, 0
  %2311 = vmatprep.subr.bf16.mxu0 0
  %2312 = vmatpush1.bf16.msra.mxu0 %v2295
  %2313 = vmatprep.subr.bf16.mxu0 0
  %2314 = vmatpush1.bf16.msra.mxu0 %v2296
  %2315 = vmatprep.subr.bf16.mxu0 0
  %2316 = vmatpush1.bf16.msra.mxu0 0
  %2317 = vmatprep.subr.bf16.mxu0 0
  %2318 = vmatpush1.bf16.msra.mxu0 0
  %2319 = vmatprep.subr.bf16.mxu0 0
  %2320 = vmatpush1.bf16.msra.mxu0 0
  %2321 = vmatprep.subr.bf16.mxu0 0
  %2322 = vmatpush1.bf16.msra.mxu0 0
  %2323 = vmatprep.subr.bf16.mxu0 0
  %2324 = vmatpush1.bf16.msra.mxu0 0
  %2325 = vmatprep.subr.bf16.mxu0 0
  %2326 = vmatpush1.bf16.msra.mxu0 0
  %2327 = vmatprep.subr.bf16.mxu0 0
  %2328 = vmatpush1.bf16.msra.mxu0 0
  %2329 = vmatprep.subr.bf16.mxu0 0
  %2330 = vmatpush1.bf16.msra.mxu0 0
  %2331 = vmatprep.subr.bf16.mxu0 0
  %2332 = vmatpush1.bf16.msra.mxu0 0
  %2333 = vmatprep.subr.bf16.mxu0 0
  %2334 = vmatpush1.bf16.msra.mxu0 0
  %2335 = vmatprep.subr.bf16.mxu0 0
  %2336 = vmatpush1.bf16.msra.mxu0 0
  %2337 = vmatprep.subr.bf16.mxu0 0
  %2338 = vmatpush1.bf16.msra.mxu0 0
  %2339 = vmatprep.subr.bf16.mxu0 0
  %2340 = vmatpush1.bf16.msra.mxu0 0
  %2341 = vmatprep.subr.bf16.mxu0 0
  %2342 = vmatpush1.bf16.msra.mxu0 0
  %2343 = vmatprep.mubr.bf16.mxu0 0
  %2344 = vmatmul.mubr.bf16.gmra.mrb[0].mxu0 %v2300
  %v2345 = vpop.f32.mrb[0].mxu0
  %v2346 = vadd.f32 %v2285, %v2345
  %v2347 = vpop.f32.mrb[0].mxu0
  %v2348 = vpop.f32.mrb[0].mxu0
  %v2349 = vadd.f32 %v2285, %v2348
  %v2350 = vpop.f32.mrb[0].mxu0
  %2351 = vmatprep.mubr.bf16.mxu0 0
  %2352 = vmatmul.mubr.bf16.gmra.mrb[0].mxu0 %v2303
  %v2353 = vpop.f32.mrb[0].mxu0
  %v2354 = vadd.f32 %v2285, %v2353
  %v2355 = vpop.f32.mrb[0].mxu0
  %v2356 = vpop.f32.mrb[0].mxu0
  %v2357 = vadd.f32 %v2285, %v2356
  %v2358 = vpop.f32.mrb[0].mxu0
  %2359 = vmatprep.mubr.bf16.mxu0 0
  %2360 = vmatmul.mubr.bf16.gmra.mrb[0].mxu0 %v2306
  %v2361 = vpop.f32.mrb[0].mxu0
  %v2362 = vadd.f32 %v2285, %v2361
  %v2363 = vpop.f32.mrb[0].mxu0
  %v2364 = vpop.f32.mrb[0].mxu0
  %v2365 = vadd.f32 %v2285, %v2364
  %v2366 = vpop.f32.mrb[0].mxu0
  %2367 = vmatprep.mubr.bf16.mxu0 0
  %2368 = vmatmul.mubr.bf16.gmra.mrb[0].mxu0 %v2309
  %v2369 = vpop.f32.mrb[0].mxu0
  %v2370 = vadd.f32 %v2285, %v2369
  %v2371 = vpop.f32.mrb[0].mxu0
  %v2372 = vpop.f32.mrb[0].mxu0
  %v2373 = vadd.f32 %v2285, %v2372
  %v2374 = vpop.f32.mrb[0].mxu0
  %2375 = vdwg.mxu0
  %vm2376 = vcmask 31744
  %2377 = vst.msk [vmem:[%s15] sm:$0xff] %vm2376, %v2346
  %2378 = vst.msk [vmem:[%s15 + $0x8] sm:$0xff] %vm2376, %v2349
  %2379 = vst.msk [vmem:[%s15 + $0x10] sm:$0xff] %vm2376, %v2354
  %2380 = vst.msk [vmem:[%s15 + $0x18] sm:$0xff] %vm2376, %v2357
  %2381 = vst.msk [vmem:[%s15 + $0x20] sm:$0xff] %vm2376, %v2362
  %2382 = vst.msk [vmem:[%s15 + $0x28] sm:$0xff] %vm2376, %v2365
  %2383 = vst.msk [vmem:[%s15 + $0x30] sm:$0xff] %vm2376, %v2370
  %2384 = vst.msk [vmem:[%s15 + $0x38] sm:$0xff] %vm2376, %v2373
  // Predicated region
  $region62: #{gat_contrastive_forward.1} parent=0 // pred_check
    _
  $region63: #{gat_contrastive_forward.1} parent=0 // pred_check_branch
    %2386 = sbr.rel (0) target = $region65
  $region64: #{gat_contrastive_forward.1} parent=0 // pred_region
    _
  $region65: #{gat_contrastive_forward.1} parent=0 // pred_fallthru
    _
  // Predicated region
  $region66: #{gat_contrastive_forward.1} parent=0 // pred_check
    _
  $region67: #{gat_contrastive_forward.1} parent=0 // pred_check_branch
    %2388 = sbr.rel (0) target = $region69
  $region68: #{gat_contrastive_forward.1} parent=0 // pred_region
    _
  $region69: #{gat_contrastive_forward.1} parent=0 // pred_fallthru
    _

</llo_original>
